<compile_context>
chip_gen: v6e
topology: v6e:2x2x1
jax: 0.10.0
libtpu: 0.0.40
codegen_flags: <defaults>
</compile_context>

<pallas_src>
import jax
import jax.numpy as jnp
from jax.experimental import pallas as pl
from jax.experimental.pallas import tpu as pltpu

X_DIM = 784          # forward() hard-codes x.view(-1, 784)
H_DIM1 = 256
H_DIM2 = 128
Z_DIM = 32
MULV_PAD = 128       # lane-dense [mu | log_var | 0...] output slab
EPS_PAD = 128        # lane-dense eps input
BATCH = 8


def vae_kernel(x_ref, eps_ref, b_ref,
               w1, w2, w3, w4, w5, w6,
               recon_ref, mulv_ref):
    f32 = jnp.float32
    bf16 = jnp.bfloat16

    # packed biases: one row per layer, f32
    b1 = b_ref[0:1, 0:H_DIM1]
    b2 = b_ref[1:2, 0:H_DIM2]
    b3 = b_ref[2:3, 0:MULV_PAD]          # [fc31 b | fc32 b | zeros]
    b4 = b_ref[3:4, 0:H_DIM2]
    b5 = b_ref[4:5, 0:H_DIM1]
    b6 = b_ref[5:6, 0:X_DIM]

    x = x_ref[...]                                        # (TB, 784) bf16

    # --- encoder (bf16 MXU inputs, f32 accumulation) ---
    h = jnp.dot(x, w1[...], preferred_element_type=f32) + b1
    h = jnp.maximum(h, 0.0).astype(bf16)
    h = jnp.dot(h, w2[...], preferred_element_type=f32) + b2
    h = jnp.maximum(h, 0.0).astype(bf16)

    # fused fc31|fc32 -> lane-dense (TB, 128) slab = [mu | log_var | 0]
    mulv = jnp.dot(h, w3[...], preferred_element_type=f32) + b3
    mu = mulv[:, :Z_DIM]
    log_var = mulv[:, Z_DIM:2 * Z_DIM]

    # --- sampling (reparameterization); eps supplied from host RNG ---
    std = jnp.exp(0.5 * log_var)                          # EUP, free slot
    z = eps_ref[:, :Z_DIM] * std + mu                     # f32 (TB, 32)

    # --- decoder ---
    d = jnp.dot(z.astype(bf16), w4[...], preferred_element_type=f32) + b4
    d = jnp.maximum(d, 0.0).astype(bf16)
    d = jnp.dot(d, w5[...], preferred_element_type=f32) + b5
    d = jnp.maximum(d, 0.0).astype(bf16)
    logits = jnp.dot(d, w6[...], preferred_element_type=f32) + b6

    recon_ref[...] = jax.nn.sigmoid(logits).astype(bf16)  # (TB, 784) bf16
    mulv_ref[...] = mulv                                  # (TB, 128) f32


def init_linear(key, in_dim, out_dim):
    """PyTorch nn.Linear default init: U(-1/sqrt(in), 1/sqrt(in))."""
    kw, kb = jax.random.split(key)
    bound = 1.0 / jnp.sqrt(jnp.float32(in_dim))
    # stored as [in, out] (transposed vs torch) so kernel does x @ W
    w = jax.random.uniform(kw, (in_dim, out_dim), jnp.float32, -bound, bound)
    b = jax.random.uniform(kb, (1, out_dim), jnp.float32, -bound, bound)
    return w, b


def make_params(key):
    keys = jax.random.split(key, 7)
    p = {}
    p["fc1"] = init_linear(keys[0], X_DIM, H_DIM1)
    p["fc2"] = init_linear(keys[1], H_DIM1, H_DIM2)
    p["fc31"] = init_linear(keys[2], H_DIM2, Z_DIM)
    p["fc32"] = init_linear(keys[3], H_DIM2, Z_DIM)
    p["fc4"] = init_linear(keys[4], Z_DIM, H_DIM2)
    p["fc5"] = init_linear(keys[5], H_DIM2, H_DIM1)
    p["fc6"] = init_linear(keys[6], H_DIM1, X_DIM)
    return p


def pack_params(p):
    """Kernel-ready operands: bf16 weights (fc31/fc32 fused + zero-padded to
    128 output lanes) and all biases packed in one (8, 784) f32 matrix."""
    bf16 = jnp.bfloat16
    w1 = p["fc1"][0]                                             # (784, 256)
    w2 = p["fc2"][0]                                             # (256, 128)
    w3 = jnp.zeros((H_DIM2, MULV_PAD), jnp.float32)
    w3 = w3.at[:, :Z_DIM].set(p["fc31"][0])
    w3 = w3.at[:, Z_DIM:2 * Z_DIM].set(p["fc32"][0])             # (128, 128)
    w4 = p["fc4"][0]                                             # (32, 128)
    w5 = p["fc5"][0]                                             # (128, 256)
    w6 = p["fc6"][0]                                             # (256, 784)
    ws = [w.astype(bf16) for w in (w1, w2, w3, w4, w5, w6)]

    bias = jnp.zeros((8, X_DIM), jnp.float32)
    bias = bias.at[0, :H_DIM1].set(p["fc1"][1][0])
    bias = bias.at[1, :H_DIM2].set(p["fc2"][1][0])
    bias = bias.at[2, :Z_DIM].set(p["fc31"][1][0])
    bias = bias.at[2, Z_DIM:2 * Z_DIM].set(p["fc32"][1][0])
    bias = bias.at[3, :H_DIM2].set(p["fc4"][1][0])
    bias = bias.at[4, :H_DIM1].set(p["fc5"][1][0])
    bias = bias.at[5, :X_DIM].set(p["fc6"][1][0])
    return {"ws": ws, "bias": bias}


def _round_up(a, m):
    return (a + m - 1) // m * m


def _pick_tile_b(B):
    """Batch tile: fill the MXU but keep >=2 grid steps for v7x megacore."""
    if B <= 128:
        return _round_up(max(B, 8), 8)
    if B < 512:
        return 128          # >=2 steps; matches v5e 128x128 MXU
    return 256              # fills v6e/v7x 256x256 MXU, still >=2 steps


def vae_forward(x, eps, packed):
    """x: anything that flattens to [-1, 784]; eps: [B, Z_DIM].
    Returns (x_recon [B,784] bf16, mu [B,Z] f32, log_var [B,Z] f32)."""
    x_flat = x.reshape(-1, X_DIM)
    B = x_flat.shape[0]
    assert eps.shape == (B, Z_DIM), "eps batch must match x.view(-1, 784) batch"

    TILE_B = _pick_tile_b(B)
    B_pad = _round_up(B, TILE_B)
    grid = (B_pad // TILE_B,)

    x_bf = x_flat.astype(jnp.bfloat16)
    if B_pad != B:
        x_in = jnp.zeros((B_pad, X_DIM), jnp.bfloat16).at[:B].set(x_bf)
    else:
        x_in = x_bf
    eps_in = jnp.zeros((B_pad, EPS_PAD), jnp.float32).at[:B, :Z_DIM].set(eps)

    ws = packed["ws"]
    bias = packed["bias"]

    batch_spec = lambda d: pl.BlockSpec((TILE_B, d), lambda i: (i, 0))
    resident = lambda shape: pl.BlockSpec(shape, lambda i: (0, 0))

    in_specs = [batch_spec(X_DIM), batch_spec(EPS_PAD), resident(bias.shape)]
    in_specs += [resident(tuple(w.shape)) for w in ws]

    out_shape = (
        jax.ShapeDtypeStruct((B_pad, X_DIM), jnp.bfloat16),      # recon
        jax.ShapeDtypeStruct((B_pad, MULV_PAD), jnp.float32),    # [mu|log_var|0]
    )
    out_specs = (batch_spec(X_DIM), batch_spec(MULV_PAD))

    flops = 2 * B_pad * (X_DIM * H_DIM1 + H_DIM1 * H_DIM2 + H_DIM2 * MULV_PAD
                         + Z_DIM * H_DIM2 + H_DIM2 * H_DIM1 + H_DIM1 * X_DIM)
    transcendentals = B_pad * (Z_DIM + X_DIM)
    bytes_weights = sum(int(w.size) * 2 for w in ws) + int(bias.size) * 4
    bytes_io = (int(x_in.size) * 2 + int(eps_in.size) * 4
                + B_pad * X_DIM * 2 + B_pad * MULV_PAD * 4)
    cost = pl.CostEstimate(flops=int(flops),
                           transcendentals=int(transcendentals),
                           bytes_accessed=int(bytes_weights + bytes_io))

    recon_pad, mulv = pl.pallas_call(
        vae_kernel,
        out_shape=out_shape,
        grid=grid,
        in_specs=in_specs,
        out_specs=out_specs,
        compiler_params=pltpu.CompilerParams(
            dimension_semantics=("parallel",)),
        cost_estimate=cost,
    )(x_in, eps_in, bias, *ws)

    recon = recon_pad[:B]                       # bf16; cast outside if needed
    mu = mulv[:B, :Z_DIM]
    log_var = mulv[:B, Z_DIM:2 * Z_DIM]
    return recon, mu, log_var


if __name__ == "__main__":
    key = jax.random.PRNGKey(0)
    k_param, k_x, k_eps = jax.random.split(key, 3)

    params = make_params(k_param)
    packed = pack_params(params)

    # MNIST-like NCHW input; forward flattens it to [-1, 784]
    x = jax.random.uniform(k_x, (BATCH, 1, 28, 28), jnp.float32)
    eps = jax.random.normal(k_eps, (BATCH, Z_DIM), jnp.float32)

    recon, mu, log_var = vae_forward(x, eps, packed)
    jax.block_until_ready((recon, mu, log_var))

    # pure-JAX reference with matching bf16 matmul inputs / f32 accumulation
    def ref_forward(x, eps, p):
        bf16 = jnp.bfloat16

        def lin(a, w, b):
            return jnp.dot(a.astype(bf16), w.astype(bf16),
                           preferred_element_type=jnp.float32) + b

        xf = x.reshape(-1, X_DIM)
        h = jax.nn.relu(lin(xf, *p["fc1"]))
        h = jax.nn.relu(lin(h, *p["fc2"]))
        mu = lin(h, *p["fc31"])
        lv = lin(h, *p["fc32"])
        z = eps * jnp.exp(0.5 * lv) + mu
        d = jax.nn.relu(lin(z, *p["fc4"]))
        d = jax.nn.relu(lin(d, *p["fc5"]))
        return jax.nn.sigmoid(lin(d, *p["fc6"])), mu, lv

    r_ref, mu_ref_v, lv_ref = ref_forward(x, eps, params)
    assert recon.shape == (BATCH, X_DIM)
    assert mu.shape == (BATCH, Z_DIM) and log_var.shape == (BATCH, Z_DIM)
    recon_f32 = recon.astype(jnp.float32)
    assert jnp.allclose(recon_f32, r_ref, atol=1e-2), \
        float(jnp.abs(recon_f32 - r_ref).max())
    assert jnp.allclose(mu, mu_ref_v, atol=1e-2), float(jnp.abs(mu - mu_ref_v).max())
    assert jnp.allclose(log_var, lv_ref, atol=1e-2), float(jnp.abs(log_var - lv_ref).max())

    print("KERNEL_OK")
</pallas_src>

<mosaic_0001>
module attributes {stable_mosaic.version = 11 : i64} {
  func.func @vae_kernel(%arg0: i32, %arg1: memref<8x784xbf16, #tpu.memory_space<vmem>>, %arg2: memref<8x128xf32, #tpu.memory_space<vmem>>, %arg3: memref<8x784xf32, #tpu.memory_space<vmem>>, %arg4: memref<784x256xbf16, #tpu.memory_space<vmem>>, %arg5: memref<256x128xbf16, #tpu.memory_space<vmem>>, %arg6: memref<128x128xbf16, #tpu.memory_space<vmem>>, %arg7: memref<32x128xbf16, #tpu.memory_space<vmem>>, %arg8: memref<128x256xbf16, #tpu.memory_space<vmem>>, %arg9: memref<256x784xbf16, #tpu.memory_space<vmem>>, %arg10: memref<8x784xbf16, #tpu.memory_space<vmem>>, %arg11: memref<8x128xf32, #tpu.memory_space<vmem>>) attributes {dimension_semantics = [#tpu.dimension_semantics<parallel>], iteration_bounds = array<i64: 1>, scalar_prefetch = 0 : i64, scratch_operands = 0 : i64, tpu.core_type = #tpu.core_type<tc>, window_params = [{transform_indices = @transform_0, window_bounds = array<i64: 8, 784>}, {transform_indices = @transform_1, window_bounds = array<i64: 8, 128>}, {pipeline_mode = #tpu.pipeline_mode<synchronous>, transform_indices = @transform_2, window_bounds = array<i64: 8, 784>}, {pipeline_mode = #tpu.pipeline_mode<synchronous>, transform_indices = @transform_3, window_bounds = array<i64: 784, 256>}, {pipeline_mode = #tpu.pipeline_mode<synchronous>, transform_indices = @transform_4, window_bounds = array<i64: 256, 128>}, {pipeline_mode = #tpu.pipeline_mode<synchronous>, transform_indices = @transform_5, window_bounds = array<i64: 128, 128>}, {pipeline_mode = #tpu.pipeline_mode<synchronous>, transform_indices = @transform_6, window_bounds = array<i64: 32, 128>}, {pipeline_mode = #tpu.pipeline_mode<synchronous>, transform_indices = @transform_7, window_bounds = array<i64: 128, 256>}, {pipeline_mode = #tpu.pipeline_mode<synchronous>, transform_indices = @transform_8, window_bounds = array<i64: 256, 784>}, {transform_indices = @transform_9, window_bounds = array<i64: 8, 784>}, {transform_indices = @transform_10, window_bounds = array<i64: 8, 128>}]} {
    %c0 = arith.constant 0 : index
    %c0_0 = arith.constant 0 : index
    %0 = vector.load %arg3[%c0, %c0_0] : memref<8x784xf32, #tpu.memory_space<vmem>>, vector<1x256xf32>
    %c1 = arith.constant 1 : index
    %c0_1 = arith.constant 0 : index
    %1 = vector.load %arg3[%c1, %c0_1] : memref<8x784xf32, #tpu.memory_space<vmem>>, vector<1x128xf32>
    %c2 = arith.constant 2 : index
    %c0_2 = arith.constant 0 : index
    %2 = vector.load %arg3[%c2, %c0_2] : memref<8x784xf32, #tpu.memory_space<vmem>>, vector<1x128xf32>
    %c3 = arith.constant 3 : index
    %c0_3 = arith.constant 0 : index
    %3 = vector.load %arg3[%c3, %c0_3] : memref<8x784xf32, #tpu.memory_space<vmem>>, vector<1x128xf32>
    %c4 = arith.constant 4 : index
    %c0_4 = arith.constant 0 : index
    %4 = vector.load %arg3[%c4, %c0_4] : memref<8x784xf32, #tpu.memory_space<vmem>>, vector<1x256xf32>
    %c5 = arith.constant 5 : index
    %c0_5 = arith.constant 0 : index
    %5 = vector.load %arg3[%c5, %c0_5] : memref<8x784xf32, #tpu.memory_space<vmem>>, vector<1x784xf32>
    %c0_6 = arith.constant 0 : index
    %c0_7 = arith.constant 0 : index
    %6 = vector.load %arg1[%c0_6, %c0_7] : memref<8x784xbf16, #tpu.memory_space<vmem>>, vector<8x784xbf16>
    %c0_8 = arith.constant 0 : index
    %c0_9 = arith.constant 0 : index
    %7 = vector.load %arg4[%c0_8, %c0_9] : memref<784x256xbf16, #tpu.memory_space<vmem>>, vector<784x256xbf16>
    %cst = arith.constant dense<0.000000e+00> : vector<8x256xf32>
    %8 = tpu.matmul %6, %7, %cst {dimension_numbers = #tpu.dot_dimension_numbers<[1], [0], [0], [1], [0, 0, 1, 1], [], []>} : vector<8x784xbf16>, vector<784x256xbf16>, vector<8x256xf32> -> vector<8x256xf32>
    %9 = vector.broadcast %0 : vector<1x256xf32> to vector<8x256xf32>
    %10 = arith.addf %8, %9 : vector<8x256xf32>
    %cst_10 = arith.constant 0.000000e+00 : f32
    %11 = vector.broadcast %cst_10 : f32 to vector<8x256xf32>
    %12 = arith.maximumf %10, %11 : vector<8x256xf32>
    %13 = arith.truncf %12 : vector<8x256xf32> to vector<8x256xbf16>
    %c0_11 = arith.constant 0 : index
    %c0_12 = arith.constant 0 : index
    %14 = vector.load %arg5[%c0_11, %c0_12] : memref<256x128xbf16, #tpu.memory_space<vmem>>, vector<256x128xbf16>
    %cst_13 = arith.constant dense<0.000000e+00> : vector<8x128xf32>
    %15 = tpu.matmul %13, %14, %cst_13 {dimension_numbers = #tpu.dot_dimension_numbers<[1], [0], [0], [1], [0, 0, 1, 1], [], []>} : vector<8x256xbf16>, vector<256x128xbf16>, vector<8x128xf32> -> vector<8x128xf32>
    %16 = vector.broadcast %1 : vector<1x128xf32> to vector<8x128xf32>
    %17 = arith.addf %15, %16 : vector<8x128xf32>
    %cst_14 = arith.constant 0.000000e+00 : f32
    %18 = vector.broadcast %cst_14 : f32 to vector<8x128xf32>
    %19 = arith.maximumf %17, %18 : vector<8x128xf32>
    %20 = arith.truncf %19 : vector<8x128xf32> to vector<8x128xbf16>
    %c0_15 = arith.constant 0 : index
    %c0_16 = arith.constant 0 : index
    %21 = vector.load %arg6[%c0_15, %c0_16] : memref<128x128xbf16, #tpu.memory_space<vmem>>, vector<128x128xbf16>
    %cst_17 = arith.constant dense<0.000000e+00> : vector<8x128xf32>
    %22 = tpu.matmul %20, %21, %cst_17 {dimension_numbers = #tpu.dot_dimension_numbers<[1], [0], [0], [1], [0, 0, 1, 1], [], []>} : vector<8x128xbf16>, vector<128x128xbf16>, vector<8x128xf32> -> vector<8x128xf32>
    %23 = vector.broadcast %2 : vector<1x128xf32> to vector<8x128xf32>
    %24 = arith.addf %22, %23 : vector<8x128xf32>
    %25 = vector.extract_strided_slice %24 {offsets = [0, 0], sizes = [8, 32], strides = [1, 1]} : vector<8x128xf32> to vector<8x32xf32>
    %26 = vector.extract_strided_slice %24 {offsets = [0, 32], sizes = [8, 32], strides = [1, 1]} : vector<8x128xf32> to vector<8x32xf32>
    %cst_18 = arith.constant 5.000000e-01 : f32
    %27 = vector.broadcast %cst_18 : f32 to vector<8x32xf32>
    %28 = arith.mulf %27, %26 : vector<8x32xf32>
    %29 = math.exp %28 : vector<8x32xf32>
    %c0_19 = arith.constant 0 : index
    %c0_20 = arith.constant 0 : index
    %30 = vector.load %arg2[%c0_19, %c0_20] : memref<8x128xf32, #tpu.memory_space<vmem>>, vector<8x32xf32>
    %31 = arith.mulf %30, %29 : vector<8x32xf32>
    %32 = arith.addf %31, %25 : vector<8x32xf32>
    %33 = arith.truncf %32 : vector<8x32xf32> to vector<8x32xbf16>
    %c0_21 = arith.constant 0 : index
    %c0_22 = arith.constant 0 : index
    %34 = vector.load %arg7[%c0_21, %c0_22] : memref<32x128xbf16, #tpu.memory_space<vmem>>, vector<32x128xbf16>
    %cst_23 = arith.constant dense<0.000000e+00> : vector<8x128xf32>
    %35 = tpu.matmul %33, %34, %cst_23 {dimension_numbers = #tpu.dot_dimension_numbers<[1], [0], [0], [1], [0, 0, 1, 1], [], []>} : vector<8x32xbf16>, vector<32x128xbf16>, vector<8x128xf32> -> vector<8x128xf32>
    %36 = vector.broadcast %3 : vector<1x128xf32> to vector<8x128xf32>
    %37 = arith.addf %35, %36 : vector<8x128xf32>
    %cst_24 = arith.constant 0.000000e+00 : f32
    %38 = vector.broadcast %cst_24 : f32 to vector<8x128xf32>
    %39 = arith.maximumf %37, %38 : vector<8x128xf32>
    %40 = arith.truncf %39 : vector<8x128xf32> to vector<8x128xbf16>
    %c0_25 = arith.constant 0 : index
    %c0_26 = arith.constant 0 : index
    %41 = vector.load %arg8[%c0_25, %c0_26] : memref<128x256xbf16, #tpu.memory_space<vmem>>, vector<128x256xbf16>
    %cst_27 = arith.constant dense<0.000000e+00> : vector<8x256xf32>
    %42 = tpu.matmul %40, %41, %cst_27 {dimension_numbers = #tpu.dot_dimension_numbers<[1], [0], [0], [1], [0, 0, 1, 1], [], []>} : vector<8x128xbf16>, vector<128x256xbf16>, vector<8x256xf32> -> vector<8x256xf32>
    %43 = vector.broadcast %4 : vector<1x256xf32> to vector<8x256xf32>
    %44 = arith.addf %42, %43 : vector<8x256xf32>
    %cst_28 = arith.constant 0.000000e+00 : f32
    %45 = vector.broadcast %cst_28 : f32 to vector<8x256xf32>
    %46 = arith.maximumf %44, %45 : vector<8x256xf32>
    %47 = arith.truncf %46 : vector<8x256xf32> to vector<8x256xbf16>
    %c0_29 = arith.constant 0 : index
    %c0_30 = arith.constant 0 : index
    %48 = vector.load %arg9[%c0_29, %c0_30] : memref<256x784xbf16, #tpu.memory_space<vmem>>, vector<256x784xbf16>
    %cst_31 = arith.constant dense<0.000000e+00> : vector<8x784xf32>
    %49 = tpu.matmul %47, %48, %cst_31 {dimension_numbers = #tpu.dot_dimension_numbers<[1], [0], [0], [1], [0, 0, 1, 1], [], []>} : vector<8x256xbf16>, vector<256x784xbf16>, vector<8x784xf32> -> vector<8x784xf32>
    %50 = vector.broadcast %5 : vector<1x784xf32> to vector<8x784xf32>
    %51 = arith.addf %49, %50 : vector<8x784xf32>
    %52 = arith.negf %51 : vector<8x784xf32>
    %53 = math.exp %52 : vector<8x784xf32>
    %cst_32 = arith.constant 1.000000e+00 : f32
    %54 = vector.broadcast %cst_32 : f32 to vector<8x784xf32>
    %55 = arith.addf %54, %53 : vector<8x784xf32>
    %56 = arith.divf %54, %55 : vector<8x784xf32>
    %57 = arith.truncf %56 : vector<8x784xf32> to vector<8x784xbf16>
    %c0_33 = arith.constant 0 : index
    %c0_34 = arith.constant 0 : index
    %58 = vector.load %arg10[%c0_33, %c0_34] : memref<8x784xbf16, #tpu.memory_space<vmem>>, vector<8x784xbf16>
    tpu.vector_store %arg10[%c0_33, %c0_34], %57 {strides = array<i32>} : memref<8x784xbf16, #tpu.memory_space<vmem>>, vector<8x784xbf16>,
    %c0_35 = arith.constant 0 : index
    %c0_36 = arith.constant 0 : index
    %59 = vector.load %arg11[%c0_35, %c0_36] : memref<8x128xf32, #tpu.memory_space<vmem>>, vector<8x128xf32>
    tpu.vector_store %arg11[%c0_35, %c0_36], %24 {strides = array<i32>} : memref<8x128xf32, #tpu.memory_space<vmem>>, vector<8x128xf32>,
    return
  }
  func.func @transform_0(%arg0: i32) -> (i32, i32) {
    %c0_i32 = arith.constant 0 : i32
    %c0_i32_0 = arith.constant 0 : i32
    return %arg0, %c0_i32 : i32, i32
  }
  func.func @transform_1(%arg0: i32) -> (i32, i32) {
    %c0_i32 = arith.constant 0 : i32
    %c0_i32_0 = arith.constant 0 : i32
    return %arg0, %c0_i32 : i32, i32
  }
  func.func @transform_2(%arg0: i32) -> (i32, i32) {
    %c0_i32 = arith.constant 0 : i32
    %c0_i32_0 = arith.constant 0 : i32
    %c0_i32_1 = arith.constant 0 : i32
    return %c0_i32, %c0_i32_0 : i32, i32
  }
  func.func @transform_3(%arg0: i32) -> (i32, i32) {
    %c0_i32 = arith.constant 0 : i32
    %c0_i32_0 = arith.constant 0 : i32
    %c0_i32_1 = arith.constant 0 : i32
    return %c0_i32, %c0_i32_0 : i32, i32
  }
  func.func @transform_4(%arg0: i32) -> (i32, i32) {
    %c0_i32 = arith.constant 0 : i32
    %c0_i32_0 = arith.constant 0 : i32
    %c0_i32_1 = arith.constant 0 : i32
    return %c0_i32, %c0_i32_0 : i32, i32
  }
  func.func @transform_5(%arg0: i32) -> (i32, i32) {
    %c0_i32 = arith.constant 0 : i32
    %c0_i32_0 = arith.constant 0 : i32
    %c0_i32_1 = arith.constant 0 : i32
    return %c0_i32, %c0_i32_0 : i32, i32
  }
  func.func @transform_6(%arg0: i32) -> (i32, i32) {
    %c0_i32 = arith.constant 0 : i32
    %c0_i32_0 = arith.constant 0 : i32
    %c0_i32_1 = arith.constant 0 : i32
    return %c0_i32, %c0_i32_0 : i32, i32
  }
  func.func @transform_7(%arg0: i32) -> (i32, i32) {
    %c0_i32 = arith.constant 0 : i32
    %c0_i32_0 = arith.constant 0 : i32
    %c0_i32_1 = arith.constant 0 : i32
    return %c0_i32, %c0_i32_0 : i32, i32
  }
  func.func @transform_8(%arg0: i32) -> (i32, i32) {
    %c0_i32 = arith.constant 0 : i32
    %c0_i32_0 = arith.constant 0 : i32
    %c0_i32_1 = arith.constant 0 : i32
    return %c0_i32, %c0_i32_0 : i32, i32
  }
  func.func @transform_9(%arg0: i32) -> (i32, i32) {
    %c0_i32 = arith.constant 0 : i32
    %c0_i32_0 = arith.constant 0 : i32
    return %arg0, %c0_i32 : i32, i32
  }
  func.func @transform_10(%arg0: i32) -> (i32, i32) {
    %c0_i32 = arith.constant 0 : i32
    %c0_i32_0 = arith.constant 0 : i32
    return %arg0, %c0_i32 : i32, i32
  }
}

</mosaic_0001>

<llo_original>
// kernel: tpu_custom_call.1
$region0: #{tpu_custom_call.1}
  #allocation0 [shape = 'u32[]', space=smem, size = 0x4, offset = 0x4, fixed_abs, tag = 'smem constant byte address 0x4 - core index']
  #allocation1 [shape = 'u32[144,128]{1,0:T(1,128)}', space=vmem, size = 0x12000, scoped, tag = 'internal scratch']
  %s0 = inlined_call_operand.vmem [shape: bf16[8,784], index: 0, kind: input, shape index: {}]
  %s1 = inlined_call_operand.vmem [shape: f32[8,128], index: 1, kind: input, shape index: {}]
  %s2 = inlined_call_operand.vmem [shape: f32[8,784], index: 2, kind: input, shape index: {}]
  %s3 = inlined_call_operand.vmem [shape: bf16[784,256], index: 3, kind: input, shape index: {}]
  %s4 = inlined_call_operand.vmem [shape: bf16[256,128], index: 4, kind: input, shape index: {}]
  %s5 = inlined_call_operand.vmem [shape: bf16[128,128], index: 5, kind: input, shape index: {}]
  %s6 = inlined_call_operand.vmem [shape: bf16[32,128], index: 6, kind: input, shape index: {}]
  %s7 = inlined_call_operand.vmem [shape: bf16[128,256], index: 7, kind: input, shape index: {}]
  %s8 = inlined_call_operand.vmem [shape: bf16[256,784], index: 8, kind: input, shape index: {}]
  %s9 = inlined_call_operand.hbm [shape: bf16[8,784], index: 9, kind: output, shape index: {0}]
  %s10 = inlined_call_operand.hbm [shape: f32[8,128], index: 10, kind: output, shape index: {1}]
  %11 = xla_tuple %s9, %s10
  %s12 = sld [smem:[#allocation0]]
  $region54: #{tpu_custom_call.1} parent=0
    _
  %s14 = ssub.s32 1, %s12
  %s15 = scalar_select 0, %s14, %s12
  $region1: #{tpu_custom_call.1} parent=0
    #allocation2 [shape = 'u8[14336]{0}', space=vmem, size = 0x3800, scoped, tag = 'output window, operand 0, single buffered']
    #allocation3 [shape = 's32[1]{0}', space=sflag, size = 0x4, scoped, tag = 'scoped memory for tpu_custom_call.1']
    #allocation4 [shape = 'u8[4096]{0}', space=vmem, size = 0x1000, scoped, tag = 'output window, operand 1, single buffered']
    #allocation5 [shape = 's32[1]{0}', space=sflag, size = 0x4, scoped, tag = 'scoped memory for tpu_custom_call.1']
    %16 = vsyncpa [#allocation3], 0
    %17 = vsyncpa [#allocation5], 0
    // Predicated region
    $region2: #{tpu_custom_call.1} parent=1 // pred_check
      _
    $region3: #{tpu_custom_call.1} parent=1 // pred_check_branch
      %19 = sbr.rel (0) target = $region5
    $region4: #{tpu_custom_call.1} parent=1 // pred_region
      _
    $region5: #{tpu_custom_call.1} parent=1 // pred_fallthru
      _
    // Predicated region
    $region6: #{tpu_custom_call.1} parent=1 // pred_check
      _
    $region7: #{tpu_custom_call.1} parent=1 // pred_check_branch
      %21 = sbr.rel (0) target = $region9
    $region8: #{tpu_custom_call.1} parent=1 // pred_region
      _
    $region9: #{tpu_custom_call.1} parent=1 // pred_fallthru
      _
    // Predicated region
    $region10: #{tpu_custom_call.1} parent=1 // pred_check
      _
    $region11: #{tpu_custom_call.1} parent=1 // pred_check_branch
      %23 = sbr.rel (0) target = $region13
    $region12: #{tpu_custom_call.1} parent=1 // pred_region
      _
    $region13: #{tpu_custom_call.1} parent=1 // pred_fallthru
      _
    // Predicated region
    $region14: #{tpu_custom_call.1} parent=1 // pred_check
      _
    $region15: #{tpu_custom_call.1} parent=1 // pred_check_branch
      %25 = sbr.rel (0) target = $region17
    $region16: #{tpu_custom_call.1} parent=1 // pred_region
      _
    $region17: #{tpu_custom_call.1} parent=1 // pred_fallthru
      _
    // Predicated region
    $region18: #{tpu_custom_call.1} parent=1 // pred_check
      _
    $region19: #{tpu_custom_call.1} parent=1 // pred_check_branch
      %27 = sbr.rel (0) target = $region21
    $region20: #{tpu_custom_call.1} parent=1 // pred_region
      _
    $region21: #{tpu_custom_call.1} parent=1 // pred_fallthru
      _
    // Predicated region
    $region22: #{tpu_custom_call.1} parent=1 // pred_check
      _
    $region23: #{tpu_custom_call.1} parent=1 // pred_check_branch
      %29 = sbr.rel (0) target = $region25
    $region24: #{tpu_custom_call.1} parent=1 // pred_region
      _
    $region25: #{tpu_custom_call.1} parent=1 // pred_fallthru
      _
    // Predicated region
    $region26: #{tpu_custom_call.1} parent=1 // pred_check
      _
    $region27: #{tpu_custom_call.1} parent=1 // pred_check_branch
      %31 = sbr.rel (0) target = $region29
    $region28: #{tpu_custom_call.1} parent=1 // pred_region
      _
    $region29: #{tpu_custom_call.1} parent=1 // pred_fallthru
      _
    // Predicated region
    $region30: #{tpu_custom_call.1} parent=1 // pred_check
      _
    $region31: #{tpu_custom_call.1} parent=1 // pred_check_branch
      %33 = sbr.rel (0) target = $region33
    $region32: #{tpu_custom_call.1} parent=1 // pred_region
      _
    $region33: #{tpu_custom_call.1} parent=1 // pred_fallthru
      _
    // Predicated region
    $region34: #{tpu_custom_call.1} parent=1 // pred_check
      _
    $region35: #{tpu_custom_call.1} parent=1 // pred_check_branch
      %35 = sbr.rel (0) target = $region37
    $region36: #{tpu_custom_call.1} parent=1 // pred_region
      _
    $region37: #{tpu_custom_call.1} parent=1 // pred_fallthru
      _
    %v37 = vld [vmem:[%s2] ss:$8 sm:$0x3]
    %v38 = vld [vmem:[%s2 + $0x1] ss:$0 sm:$0xff]
    %v39 = vld [vmem:[%s2 + $0x2] ss:$0 sm:$0xff]
    %v40 = vld [vmem:[%s2 + $0x3] ss:$0 sm:$0xff]
    %s41 = scalar_lea.vmem %s2, 4
    %v42 = vld [vmem:[%s41] ss:$8 sm:$0x3]
    %s43 = scalar_lea.vmem %s2, 5
    %v44 = vld [vmem:[%s43] ss:$8 sm:$0xf]
    %v45 = vld [vmem:[%s43] ss:$8 sm:$0x70]
    %v46 = vor.u32 %v44, %v45
    %v47 = vld [vmem:[%s0] sm:$0xff]
    %v48 = vld [vmem:[%s0 + $0x8] sm:$0xff]
    %v49 = vld [vmem:[%s0 + $0x10] sm:$0xff]
    %v50 = vld [vmem:[%s0 + $0x18] sm:$0xf]
    %v51 = vld [vmem:[%s3] sm:$0xff]
    %v52 = vld [vmem:[%s3 + $0x8] sm:$0xff]
    %v53 = vld [vmem:[%s3 + $0x10] sm:$0xff]
    %v54 = vld [vmem:[%s3 + $0x18] sm:$0xff]
    %v55 = vld [vmem:[%s3 + $0x20] sm:$0xff]
    %v56 = vld [vmem:[%s3 + $0x28] sm:$0xff]
    %v57 = vld [vmem:[%s3 + $0x30] sm:$0xff]
    %v58 = vld [vmem:[%s3 + $0x38] sm:$0xff]
    %v59 = vld [vmem:[%s3 + $0x40] sm:$0xff]
    %v60 = vld [vmem:[%s3 + $0x48] sm:$0xff]
    %v61 = vld [vmem:[%s3 + $0x50] sm:$0xff]
    %v62 = vld [vmem:[%s3 + $0x58] sm:$0xff]
    %v63 = vld [vmem:[%s3 + $0x60] sm:$0xff]
    %v64 = vld [vmem:[%s3 + $0x68] sm:$0xff]
    %v65 = vld [vmem:[%s3 + $0x70] sm:$0xff]
    %v66 = vld [vmem:[%s3 + $0x78] sm:$0xff]
    %v67 = vld [vmem:[%s3 + $0x80] sm:$0xff]
    %v68 = vld [vmem:[%s3 + $0x88] sm:$0xff]
    %v69 = vld [vmem:[%s3 + $0x90] sm:$0xff]
    %v70 = vld [vmem:[%s3 + $0x98] sm:$0xff]
    %v71 = vld [vmem:[%s3 + $0xa0] sm:$0xff]
    %v72 = vld [vmem:[%s3 + $0xa8] sm:$0xff]
    %v73 = vld [vmem:[%s3 + $0xb0] sm:$0xff]
    %v74 = vld [vmem:[%s3 + $0xb8] sm:$0xff]
    %v75 = vld [vmem:[%s3 + $0xc0] sm:$0xff]
    %v76 = vld [vmem:[%s3 + $0xc8] sm:$0xff]
    %v77 = vld [vmem:[%s3 + $0xd0] sm:$0xff]
    %v78 = vld [vmem:[%s3 + $0xd8] sm:$0xff]
    %v79 = vld [vmem:[%s3 + $0xe0] sm:$0xff]
    %v80 = vld [vmem:[%s3 + $0xe8] sm:$0xff]
    %v81 = vld [vmem:[%s3 + $0xf0] sm:$0xff]
    %v82 = vld [vmem:[%s3 + $0xf8] sm:$0xff]
    %v83 = vld [vmem:[%s3 + $0x100] sm:$0xff]
    %v84 = vld [vmem:[%s3 + $0x108] sm:$0xff]
    %v85 = vld [vmem:[%s3 + $0x110] sm:$0xff]
    %v86 = vld [vmem:[%s3 + $0x118] sm:$0xff]
    %v87 = vld [vmem:[%s3 + $0x120] sm:$0xff]
    %v88 = vld [vmem:[%s3 + $0x128] sm:$0xff]
    %v89 = vld [vmem:[%s3 + $0x130] sm:$0xff]
    %v90 = vld [vmem:[%s3 + $0x138] sm:$0xff]
    %v91 = vld [vmem:[%s3 + $0x140] sm:$0xff]
    %v92 = vld [vmem:[%s3 + $0x148] sm:$0xff]
    %v93 = vld [vmem:[%s3 + $0x150] sm:$0xff]
    %v94 = vld [vmem:[%s3 + $0x158] sm:$0xff]
    %v95 = vld [vmem:[%s3 + $0x160] sm:$0xff]
    %v96 = vld [vmem:[%s3 + $0x168] sm:$0xff]
    %v97 = vld [vmem:[%s3 + $0x170] sm:$0xff]
    %v98 = vld [vmem:[%s3 + $0x178] sm:$0xff]
    %v99 = vld [vmem:[%s3 + $0x180] sm:$0xff]
    %v100 = vld [vmem:[%s3 + $0x188] sm:$0xff]
    %v101 = vld [vmem:[%s3 + $0x190] sm:$0xff]
    %v102 = vld [vmem:[%s3 + $0x198] sm:$0xff]
    %v103 = vld [vmem:[%s3 + $0x1a0] sm:$0xff]
    %v104 = vld [vmem:[%s3 + $0x1a8] sm:$0xff]
    %v105 = vld [vmem:[%s3 + $0x1b0] sm:$0xff]
    %v106 = vld [vmem:[%s3 + $0x1b8] sm:$0xff]
    %v107 = vld [vmem:[%s3 + $0x1c0] sm:$0xff]
    %v108 = vld [vmem:[%s3 + $0x1c8] sm:$0xff]
    %v109 = vld [vmem:[%s3 + $0x1d0] sm:$0xff]
    %v110 = vld [vmem:[%s3 + $0x1d8] sm:$0xff]
    %v111 = vld [vmem:[%s3 + $0x1e0] sm:$0xff]
    %v112 = vld [vmem:[%s3 + $0x1e8] sm:$0xff]
    %v113 = vld [vmem:[%s3 + $0x1f0] sm:$0xff]
    %v114 = vld [vmem:[%s3 + $0x1f8] sm:$0xff]
    %v115 = vld [vmem:[%s3 + $0x200] sm:$0xff]
    %v116 = vld [vmem:[%s3 + $0x208] sm:$0xff]
    %v117 = vld [vmem:[%s3 + $0x210] sm:$0xff]
    %v118 = vld [vmem:[%s3 + $0x218] sm:$0xff]
    %v119 = vld [vmem:[%s3 + $0x220] sm:$0xff]
    %v120 = vld [vmem:[%s3 + $0x228] sm:$0xff]
    %v121 = vld [vmem:[%s3 + $0x230] sm:$0xff]
    %v122 = vld [vmem:[%s3 + $0x238] sm:$0xff]
    %v123 = vld [vmem:[%s3 + $0x240] sm:$0xff]
    %v124 = vld [vmem:[%s3 + $0x248] sm:$0xff]
    %v125 = vld [vmem:[%s3 + $0x250] sm:$0xff]
    %v126 = vld [vmem:[%s3 + $0x258] sm:$0xff]
    %v127 = vld [vmem:[%s3 + $0x260] sm:$0xff]
    %v128 = vld [vmem:[%s3 + $0x268] sm:$0xff]
    %v129 = vld [vmem:[%s3 + $0x270] sm:$0xff]
    %v130 = vld [vmem:[%s3 + $0x278] sm:$0xff]
    %v131 = vld [vmem:[%s3 + $0x280] sm:$0xff]
    %v132 = vld [vmem:[%s3 + $0x288] sm:$0xff]
    %v133 = vld [vmem:[%s3 + $0x290] sm:$0xff]
    %v134 = vld [vmem:[%s3 + $0x298] sm:$0xff]
    %v135 = vld [vmem:[%s3 + $0x2a0] sm:$0xff]
    %v136 = vld [vmem:[%s3 + $0x2a8] sm:$0xff]
    %v137 = vld [vmem:[%s3 + $0x2b0] sm:$0xff]
    %v138 = vld [vmem:[%s3 + $0x2b8] sm:$0xff]
    %v139 = vld [vmem:[%s3 + $0x2c0] sm:$0xff]
    %v140 = vld [vmem:[%s3 + $0x2c8] sm:$0xff]
    %v141 = vld [vmem:[%s3 + $0x2d0] sm:$0xff]
    %v142 = vld [vmem:[%s3 + $0x2d8] sm:$0xff]
    %v143 = vld [vmem:[%s3 + $0x2e0] sm:$0xff]
    %v144 = vld [vmem:[%s3 + $0x2e8] sm:$0xff]
    %v145 = vld [vmem:[%s3 + $0x2f0] sm:$0xff]
    %v146 = vld [vmem:[%s3 + $0x2f8] sm:$0xff]
    %v147 = vld [vmem:[%s3 + $0x300] sm:$0xff]
    %v148 = vld [vmem:[%s3 + $0x308] sm:$0xff]
    %v150 = vlaneseq
    %v151 = vshrl.u32 %v150, 7
    %v152 = vsub.s32 0, %v151
    %v153 = vrot.slane %v37, %v152
    %v154 = vlaneseq
    %v155 = vshrl.u32 %v154, 7
    %v156 = vsub.s32 1, %v155
    %v157 = vrot.slane %v37, %v156
    %v164 = vunpack.c.l.b16 %v47
    %v165 = vunpack.c.h.b16 %v47
    %v166 = vunpack.c.l.b16 %v48
    %v167 = vunpack.c.h.b16 %v48
    %v168 = vunpack.c.l.b16 %v49
    %v169 = vunpack.c.h.b16 %v49
    %v170 = vunpack.c.l.b16 %v50
    %v171 = vpack.c.b16 %v164, %v164
    %v172 = vpack.c.b16 %v165, %v165
    %v173 = vpack.c.b16 %v166, %v166
    %v174 = vpack.c.b16 %v167, %v167
    %v175 = vpack.c.b16 %v168, %v168
    %v176 = vpack.c.b16 %v169, %v169
    %v177 = vpack.c.b16 %v170, %v170
    %v282 = vunpack.c.l.b16 %v51
    %v283 = vunpack.c.h.b16 %v51
    %v284 = vunpack.c.l.b16 %v52
    %v285 = vunpack.c.h.b16 %v52
    %v286 = vunpack.c.l.b16 %v53
    %v287 = vunpack.c.h.b16 %v53
    %v288 = vunpack.c.l.b16 %v54
    %v289 = vunpack.c.h.b16 %v54
    %v290 = vunpack.c.l.b16 %v55
    %v291 = vunpack.c.h.b16 %v55
    %v292 = vunpack.c.l.b16 %v56
    %v293 = vunpack.c.h.b16 %v56
    %v294 = vunpack.c.l.b16 %v57
    %v295 = vunpack.c.h.b16 %v57
    %v296 = vunpack.c.l.b16 %v58
    %v297 = vunpack.c.h.b16 %v58
    %v298 = vunpack.c.l.b16 %v59
    %v299 = vunpack.c.h.b16 %v59
    %v300 = vunpack.c.l.b16 %v60
    %v301 = vunpack.c.h.b16 %v60
    %v302 = vunpack.c.l.b16 %v61
    %v303 = vunpack.c.h.b16 %v61
    %v304 = vunpack.c.l.b16 %v62
    %v305 = vunpack.c.h.b16 %v62
    %v306 = vunpack.c.l.b16 %v63
    %v307 = vunpack.c.h.b16 %v63
    %v308 = vunpack.c.l.b16 %v64
    %v309 = vunpack.c.h.b16 %v64
    %v310 = vunpack.c.l.b16 %v65
    %v311 = vunpack.c.h.b16 %v65
    %v312 = vunpack.c.l.b16 %v66
    %v313 = vunpack.c.h.b16 %v66
    %v314 = vunpack.c.l.b16 %v67
    %v315 = vunpack.c.h.b16 %v67
    %v316 = vunpack.c.l.b16 %v68
    %v317 = vunpack.c.h.b16 %v68
    %v318 = vunpack.c.l.b16 %v69
    %v319 = vunpack.c.h.b16 %v69
    %v320 = vunpack.c.l.b16 %v70
    %v321 = vunpack.c.h.b16 %v70
    %v322 = vunpack.c.l.b16 %v71
    %v323 = vunpack.c.h.b16 %v71
    %v324 = vunpack.c.l.b16 %v72
    %v325 = vunpack.c.h.b16 %v72
    %v326 = vunpack.c.l.b16 %v73
    %v327 = vunpack.c.h.b16 %v73
    %v328 = vunpack.c.l.b16 %v74
    %v329 = vunpack.c.h.b16 %v74
    %v330 = vunpack.c.l.b16 %v75
    %v331 = vunpack.c.h.b16 %v75
    %v332 = vunpack.c.l.b16 %v76
    %v333 = vunpack.c.h.b16 %v76
    %v334 = vunpack.c.l.b16 %v77
    %v335 = vunpack.c.h.b16 %v77
    %v336 = vunpack.c.l.b16 %v78
    %v337 = vunpack.c.h.b16 %v78
    %v338 = vunpack.c.l.b16 %v79
    %v339 = vunpack.c.h.b16 %v79
    %v340 = vunpack.c.l.b16 %v80
    %v341 = vunpack.c.h.b16 %v80
    %v342 = vunpack.c.l.b16 %v81
    %v343 = vunpack.c.h.b16 %v81
    %v344 = vunpack.c.l.b16 %v82
    %v345 = vunpack.c.h.b16 %v82
    %v346 = vunpack.c.l.b16 %v83
    %v347 = vunpack.c.h.b16 %v83
    %v348 = vunpack.c.l.b16 %v84
    %v349 = vunpack.c.h.b16 %v84
    %v350 = vunpack.c.l.b16 %v85
    %v351 = vunpack.c.h.b16 %v85
    %v352 = vunpack.c.l.b16 %v86
    %v353 = vunpack.c.h.b16 %v86
    %v354 = vunpack.c.l.b16 %v87
    %v355 = vunpack.c.h.b16 %v87
    %v356 = vunpack.c.l.b16 %v88
    %v357 = vunpack.c.h.b16 %v88
    %v358 = vunpack.c.l.b16 %v89
    %v359 = vunpack.c.h.b16 %v89
    %v360 = vunpack.c.l.b16 %v90
    %v361 = vunpack.c.h.b16 %v90
    %v362 = vunpack.c.l.b16 %v91
    %v363 = vunpack.c.h.b16 %v91
    %v364 = vunpack.c.l.b16 %v92
    %v365 = vunpack.c.h.b16 %v92
    %v366 = vunpack.c.l.b16 %v93
    %v367 = vunpack.c.h.b16 %v93
    %v368 = vunpack.c.l.b16 %v94
    %v369 = vunpack.c.h.b16 %v94
    %v370 = vunpack.c.l.b16 %v95
    %v371 = vunpack.c.h.b16 %v95
    %v372 = vunpack.c.l.b16 %v96
    %v373 = vunpack.c.h.b16 %v96
    %v374 = vunpack.c.l.b16 %v97
    %v375 = vunpack.c.h.b16 %v97
    %v376 = vunpack.c.l.b16 %v98
    %v377 = vunpack.c.h.b16 %v98
    %v378 = vunpack.c.l.b16 %v99
    %v379 = vunpack.c.h.b16 %v99
    %v380 = vunpack.c.l.b16 %v100
    %v381 = vunpack.c.h.b16 %v100
    %v382 = vunpack.c.l.b16 %v101
    %v383 = vunpack.c.h.b16 %v101
    %v384 = vunpack.c.l.b16 %v102
    %v385 = vunpack.c.h.b16 %v102
    %v386 = vunpack.c.l.b16 %v103
    %v387 = vunpack.c.h.b16 %v103
    %v388 = vunpack.c.l.b16 %v104
    %v389 = vunpack.c.h.b16 %v104
    %v390 = vunpack.c.l.b16 %v105
    %v391 = vunpack.c.h.b16 %v105
    %v392 = vunpack.c.l.b16 %v106
    %v393 = vunpack.c.h.b16 %v106
    %v394 = vunpack.c.l.b16 %v107
    %v395 = vunpack.c.h.b16 %v107
    %v396 = vunpack.c.l.b16 %v108
    %v397 = vunpack.c.h.b16 %v108
    %v398 = vunpack.c.l.b16 %v109
    %v399 = vunpack.c.h.b16 %v109
    %v400 = vunpack.c.l.b16 %v110
    %v401 = vunpack.c.h.b16 %v110
    %v402 = vunpack.c.l.b16 %v111
    %v403 = vunpack.c.h.b16 %v111
    %v404 = vunpack.c.l.b16 %v112
    %v405 = vunpack.c.h.b16 %v112
    %v406 = vunpack.c.l.b16 %v113
    %v407 = vunpack.c.h.b16 %v113
    %v408 = vunpack.c.l.b16 %v114
    %v409 = vunpack.c.h.b16 %v114
    %v410 = vunpack.c.l.b16 %v115
    %v411 = vunpack.c.h.b16 %v115
    %v412 = vunpack.c.l.b16 %v116
    %v413 = vunpack.c.h.b16 %v116
    %v414 = vunpack.c.l.b16 %v117
    %v415 = vunpack.c.h.b16 %v117
    %v416 = vunpack.c.l.b16 %v118
    %v417 = vunpack.c.h.b16 %v118
    %v418 = vunpack.c.l.b16 %v119
    %v419 = vunpack.c.h.b16 %v119
    %v420 = vunpack.c.l.b16 %v120
    %v421 = vunpack.c.h.b16 %v120
    %v422 = vunpack.c.l.b16 %v121
    %v423 = vunpack.c.h.b16 %v121
    %v424 = vunpack.c.l.b16 %v122
    %v425 = vunpack.c.h.b16 %v122
    %v426 = vunpack.c.l.b16 %v123
    %v427 = vunpack.c.h.b16 %v123
    %v428 = vunpack.c.l.b16 %v124
    %v429 = vunpack.c.h.b16 %v124
    %v430 = vunpack.c.l.b16 %v125
    %v431 = vunpack.c.h.b16 %v125
    %v432 = vunpack.c.l.b16 %v126
    %v433 = vunpack.c.h.b16 %v126
    %v434 = vunpack.c.l.b16 %v127
    %v435 = vunpack.c.h.b16 %v127
    %v436 = vunpack.c.l.b16 %v128
    %v437 = vunpack.c.h.b16 %v128
    %v438 = vunpack.c.l.b16 %v129
    %v439 = vunpack.c.h.b16 %v129
    %v440 = vunpack.c.l.b16 %v130
    %v441 = vunpack.c.h.b16 %v130
    %v442 = vunpack.c.l.b16 %v131
    %v443 = vunpack.c.h.b16 %v131
    %v444 = vunpack.c.l.b16 %v132
    %v445 = vunpack.c.h.b16 %v132
    %v446 = vunpack.c.l.b16 %v133
    %v447 = vunpack.c.h.b16 %v133
    %v448 = vunpack.c.l.b16 %v134
    %v449 = vunpack.c.h.b16 %v134
    %v450 = vunpack.c.l.b16 %v135
    %v451 = vunpack.c.h.b16 %v135
    %v452 = vunpack.c.l.b16 %v136
    %v453 = vunpack.c.h.b16 %v136
    %v454 = vunpack.c.l.b16 %v137
    %v455 = vunpack.c.h.b16 %v137
    %v456 = vunpack.c.l.b16 %v138
    %v457 = vunpack.c.h.b16 %v138
    %v458 = vunpack.c.l.b16 %v139
    %v459 = vunpack.c.h.b16 %v139
    %v460 = vunpack.c.l.b16 %v140
    %v461 = vunpack.c.h.b16 %v140
    %v462 = vunpack.c.l.b16 %v141
    %v463 = vunpack.c.h.b16 %v141
    %v464 = vunpack.c.l.b16 %v142
    %v465 = vunpack.c.h.b16 %v142
    %v466 = vunpack.c.l.b16 %v143
    %v467 = vunpack.c.h.b16 %v143
    %v468 = vunpack.c.l.b16 %v144
    %v469 = vunpack.c.h.b16 %v144
    %v470 = vunpack.c.l.b16 %v145
    %v471 = vunpack.c.h.b16 %v145
    %v472 = vunpack.c.l.b16 %v146
    %v473 = vunpack.c.h.b16 %v146
    %v474 = vunpack.c.l.b16 %v147
    %v475 = vunpack.c.h.b16 %v147
    %v476 = vunpack.c.l.b16 %v148
    %v477 = vunpack.c.h.b16 %v148
    %v478 = vpack.c.b16 %v284, %v282
    %v479 = vpack.c.b16 %v285, %v283
    %v480 = vpack.c.b16 %v288, %v286
    %v481 = vpack.c.b16 %v289, %v287
    %v482 = vpack.c.b16 %v292, %v290
    %v483 = vpack.c.b16 %v293, %v291
    %v484 = vpack.c.b16 %v296, %v294
    %v485 = vpack.c.b16 %v297, %v295
    %v486 = vpack.c.b16 %v300, %v298
    %v487 = vpack.c.b16 %v301, %v299
    %v488 = vpack.c.b16 %v304, %v302
    %v489 = vpack.c.b16 %v305, %v303
    %v490 = vpack.c.b16 %v308, %v306
    %v491 = vpack.c.b16 %v309, %v307
    %v492 = vpack.c.b16 %v312, %v310
    %v493 = vpack.c.b16 %v313, %v311
    %v494 = vpack.c.b16 %v316, %v314
    %v495 = vpack.c.b16 %v317, %v315
    %v496 = vpack.c.b16 %v320, %v318
    %v497 = vpack.c.b16 %v321, %v319
    %v498 = vpack.c.b16 %v324, %v322
    %v499 = vpack.c.b16 %v325, %v323
    %v500 = vpack.c.b16 %v328, %v326
    %v501 = vpack.c.b16 %v329, %v327
    %v502 = vpack.c.b16 %v332, %v330
    %v503 = vpack.c.b16 %v333, %v331
    %v504 = vpack.c.b16 %v336, %v334
    %v505 = vpack.c.b16 %v337, %v335
    %v506 = vpack.c.b16 %v340, %v338
    %v507 = vpack.c.b16 %v341, %v339
    %v508 = vpack.c.b16 %v344, %v342
    %v509 = vpack.c.b16 %v345, %v343
    %v510 = vpack.c.b16 %v348, %v346
    %v511 = vpack.c.b16 %v349, %v347
    %v512 = vpack.c.b16 %v352, %v350
    %v513 = vpack.c.b16 %v353, %v351
    %v514 = vpack.c.b16 %v356, %v354
    %v515 = vpack.c.b16 %v357, %v355
    %v516 = vpack.c.b16 %v360, %v358
    %v517 = vpack.c.b16 %v361, %v359
    %v518 = vpack.c.b16 %v364, %v362
    %v519 = vpack.c.b16 %v365, %v363
    %v520 = vpack.c.b16 %v368, %v366
    %v521 = vpack.c.b16 %v369, %v367
    %v522 = vpack.c.b16 %v372, %v370
    %v523 = vpack.c.b16 %v373, %v371
    %v524 = vpack.c.b16 %v376, %v374
    %v525 = vpack.c.b16 %v377, %v375
    %v526 = vpack.c.b16 %v380, %v378
    %v527 = vpack.c.b16 %v381, %v379
    %v528 = vpack.c.b16 %v384, %v382
    %v529 = vpack.c.b16 %v385, %v383
    %v530 = vpack.c.b16 %v388, %v386
    %v531 = vpack.c.b16 %v389, %v387
    %v532 = vpack.c.b16 %v392, %v390
    %v533 = vpack.c.b16 %v393, %v391
    %v534 = vpack.c.b16 %v396, %v394
    %v535 = vpack.c.b16 %v397, %v395
    %v536 = vpack.c.b16 %v400, %v398
    %v537 = vpack.c.b16 %v401, %v399
    %v538 = vpack.c.b16 %v404, %v402
    %v539 = vpack.c.b16 %v405, %v403
    %v540 = vpack.c.b16 %v408, %v406
    %v541 = vpack.c.b16 %v409, %v407
    %v542 = vpack.c.b16 %v412, %v410
    %v543 = vpack.c.b16 %v413, %v411
    %v544 = vpack.c.b16 %v416, %v414
    %v545 = vpack.c.b16 %v417, %v415
    %v546 = vpack.c.b16 %v420, %v418
    %v547 = vpack.c.b16 %v421, %v419
    %v548 = vpack.c.b16 %v424, %v422
    %v549 = vpack.c.b16 %v425, %v423
    %v550 = vpack.c.b16 %v428, %v426
    %v551 = vpack.c.b16 %v429, %v427
    %v552 = vpack.c.b16 %v432, %v430
    %v553 = vpack.c.b16 %v433, %v431
    %v554 = vpack.c.b16 %v436, %v434
    %v555 = vpack.c.b16 %v437, %v435
    %v556 = vpack.c.b16 %v440, %v438
    %v557 = vpack.c.b16 %v441, %v439
    %v558 = vpack.c.b16 %v444, %v442
    %v559 = vpack.c.b16 %v445, %v443
    %v560 = vpack.c.b16 %v448, %v446
    %v561 = vpack.c.b16 %v449, %v447
    %v562 = vpack.c.b16 %v452, %v450
    %v563 = vpack.c.b16 %v453, %v451
    %v564 = vpack.c.b16 %v456, %v454
    %v565 = vpack.c.b16 %v457, %v455
    %v566 = vpack.c.b16 %v460, %v458
    %v567 = vpack.c.b16 %v461, %v459
    %v568 = vpack.c.b16 %v464, %v462
    %v569 = vpack.c.b16 %v465, %v463
    %v570 = vpack.c.b16 %v468, %v466
    %v571 = vpack.c.b16 %v469, %v467
    %v572 = vpack.c.b16 %v472, %v470
    %v573 = vpack.c.b16 %v473, %v471
    %v574 = vpack.c.b16 %v476, %v474
    %v575 = vpack.c.b16 %v477, %v475
    %vm674 = vcmask 130048
    %v676 = vsel %vm674, %v177, 0
    %678 = vmatprep.subr.bf16.mxu0 %v493
    %679 = vmatpush1.bf16.msra.mxu0 %v492
    %680 = vmatprep.subr.bf16.mxu0 %v491
    %681 = vmatpush1.bf16.msra.mxu0 %v490
    %682 = vmatprep.subr.bf16.mxu0 %v489
    %683 = vmatpush1.bf16.msra.mxu0 %v488
    %684 = vmatprep.subr.bf16.mxu0 %v487
    %685 = vmatpush1.bf16.msra.mxu0 %v486
    %686 = vmatprep.subr.bf16.mxu0 %v485
    %687 = vmatpush1.bf16.msra.mxu0 %v484
    %688 = vmatprep.subr.bf16.mxu0 %v483
    %689 = vmatpush1.bf16.msra.mxu0 %v482
    %690 = vmatprep.subr.bf16.mxu0 %v481
    %691 = vmatpush1.bf16.msra.mxu0 %v480
    %692 = vmatprep.subr.bf16.mxu0 %v479
    %693 = vmatpush1.bf16.msra.mxu0 %v478
    %694 = vmatprep.subr.bf16.mxu0 %v509
    %695 = vmatpush2.bf16.msra.mxu0 %v508
    %696 = vmatprep.subr.bf16.mxu0 %v507
    %697 = vmatpush2.bf16.msra.mxu0 %v506
    %698 = vmatprep.subr.bf16.mxu0 %v505
    %699 = vmatpush2.bf16.msra.mxu0 %v504
    %700 = vmatprep.subr.bf16.mxu0 %v503
    %701 = vmatpush2.bf16.msra.mxu0 %v502
    %702 = vmatprep.subr.bf16.mxu0 %v501
    %703 = vmatpush2.bf16.msra.mxu0 %v500
    %704 = vmatprep.subr.bf16.mxu0 %v499
    %705 = vmatpush2.bf16.msra.mxu0 %v498
    %706 = vmatprep.subr.bf16.mxu0 %v497
    %707 = vmatpush2.bf16.msra.mxu0 %v496
    %708 = vmatprep.subr.bf16.mxu0 %v495
    %709 = vmatpush2.bf16.msra.mxu0 %v494
    %710 = vmatprep.mubr.bf16.mxu0 %v172
    %711 = vmatmul.mubr.bf16.gmra.mxu0 %v171
    %v712 = vpop.f32.mrf.mxu0
    %v713 = vadd.f32 %v153, %v712
    %v714 = vpop.f32.mrf.mxu0
    %v715 = vadd.f32 %v157, %v714
    %v716 = vpop.f32.mrf.mxu0
    %v717 = vpop.f32.mrf.mxu0
    %718 = vdwg.mxu0
    %719 = vmatprep.subr.bf16.mxu0 %v525
    %720 = vmatpush1.bf16.msra.mxu0 %v524
    %721 = vmatprep.subr.bf16.mxu0 %v523
    %722 = vmatpush1.bf16.msra.mxu0 %v522
    %723 = vmatprep.subr.bf16.mxu0 %v521
    %724 = vmatpush1.bf16.msra.mxu0 %v520
    %725 = vmatprep.subr.bf16.mxu0 %v519
    %726 = vmatpush1.bf16.msra.mxu0 %v518
    %727 = vmatprep.subr.bf16.mxu0 %v517
    %728 = vmatpush1.bf16.msra.mxu0 %v516
    %729 = vmatprep.subr.bf16.mxu0 %v515
    %730 = vmatpush1.bf16.msra.mxu0 %v514
    %731 = vmatprep.subr.bf16.mxu0 %v513
    %732 = vmatpush1.bf16.msra.mxu0 %v512
    %733 = vmatprep.subr.bf16.mxu0 %v511
    %734 = vmatpush1.bf16.msra.mxu0 %v510
    %735 = vmatprep.subr.bf16.mxu0 %v541
    %736 = vmatpush2.bf16.msra.mxu0 %v540
    %737 = vmatprep.subr.bf16.mxu0 %v539
    %738 = vmatpush2.bf16.msra.mxu0 %v538
    %739 = vmatprep.subr.bf16.mxu0 %v537
    %740 = vmatpush2.bf16.msra.mxu0 %v536
    %741 = vmatprep.subr.bf16.mxu0 %v535
    %742 = vmatpush2.bf16.msra.mxu0 %v534
    %743 = vmatprep.subr.bf16.mxu0 %v533
    %744 = vmatpush2.bf16.msra.mxu0 %v532
    %745 = vmatprep.subr.bf16.mxu0 %v531
    %746 = vmatpush2.bf16.msra.mxu0 %v530
    %747 = vmatprep.subr.bf16.mxu0 %v529
    %748 = vmatpush2.bf16.msra.mxu0 %v528
    %749 = vmatprep.subr.bf16.mxu0 %v527
    %750 = vmatpush2.bf16.msra.mxu0 %v526
    %751 = vmatprep.mubr.bf16.mxu0 %v174
    %752 = vmatmul.mubr.bf16.gmra.mxu0 %v173
    %v753 = vpop.f32.mrf.mxu0
    %v754 = vadd.f32 %v713, %v753
    %v755 = vpop.f32.mrf.mxu0
    %v756 = vadd.f32 %v715, %v755
    %v757 = vpop.f32.mrf.mxu0
    %v758 = vpop.f32.mrf.mxu0
    %759 = vdwg.mxu0
    %760 = vmatprep.subr.bf16.mxu0 %v557
    %761 = vmatpush1.bf16.msra.mxu0 %v556
    %762 = vmatprep.subr.bf16.mxu0 %v555
    %763 = vmatpush1.bf16.msra.mxu0 %v554
    %764 = vmatprep.subr.bf16.mxu0 %v553
    %765 = vmatpush1.bf16.msra.mxu0 %v552
    %766 = vmatprep.subr.bf16.mxu0 %v551
    %767 = vmatpush1.bf16.msra.mxu0 %v550
    %768 = vmatprep.subr.bf16.mxu0 %v549
    %769 = vmatpush1.bf16.msra.mxu0 %v548
    %770 = vmatprep.subr.bf16.mxu0 %v547
    %771 = vmatpush1.bf16.msra.mxu0 %v546
    %772 = vmatprep.subr.bf16.mxu0 %v545
    %773 = vmatpush1.bf16.msra.mxu0 %v544
    %774 = vmatprep.subr.bf16.mxu0 %v543
    %775 = vmatpush1.bf16.msra.mxu0 %v542
    %776 = vmatprep.subr.bf16.mxu0 %v573
    %777 = vmatpush2.bf16.msra.mxu0 %v572
    %778 = vmatprep.subr.bf16.mxu0 %v571
    %779 = vmatpush2.bf16.msra.mxu0 %v570
    %780 = vmatprep.subr.bf16.mxu0 %v569
    %781 = vmatpush2.bf16.msra.mxu0 %v568
    %782 = vmatprep.subr.bf16.mxu0 %v567
    %783 = vmatpush2.bf16.msra.mxu0 %v566
    %784 = vmatprep.subr.bf16.mxu0 %v565
    %785 = vmatpush2.bf16.msra.mxu0 %v564
    %786 = vmatprep.subr.bf16.mxu0 %v563
    %787 = vmatpush2.bf16.msra.mxu0 %v562
    %788 = vmatprep.subr.bf16.mxu0 %v561
    %789 = vmatpush2.bf16.msra.mxu0 %v560
    %790 = vmatprep.subr.bf16.mxu0 %v559
    %791 = vmatpush2.bf16.msra.mxu0 %v558
    %792 = vmatprep.mubr.bf16.mxu0 %v176
    %793 = vmatmul.mubr.bf16.gmra.mxu0 %v175
    %v794 = vpop.f32.mrf.mxu0
    %v795 = vadd.f32 %v754, %v794
    %v796 = vpop.f32.mrf.mxu0
    %v797 = vadd.f32 %v756, %v796
    %v798 = vpop.f32.mrf.mxu0
    %v799 = vpop.f32.mrf.mxu0
    %800 = vdwg.mxu0
    %801 = vmatprep.subr.bf16.mxu0 0
    %802 = vmatpush1.bf16.msra.mxu0 0
    %803 = vmatprep.subr.bf16.mxu0 0
    %804 = vmatpush1.bf16.msra.mxu0 0
    %805 = vmatprep.subr.bf16.mxu0 0
    %806 = vmatpush1.bf16.msra.mxu0 0
    %807 = vmatprep.subr.bf16.mxu0 0
    %808 = vmatpush1.bf16.msra.mxu0 0
    %809 = vmatprep.subr.bf16.mxu0 0
    %810 = vmatpush1.bf16.msra.mxu0 0
    %811 = vmatprep.subr.bf16.mxu0 0
    %812 = vmatpush1.bf16.msra.mxu0 0
    %813 = vmatprep.subr.bf16.mxu0 0
    %814 = vmatpush1.bf16.msra.mxu0 0
    %815 = vmatprep.subr.bf16.mxu0 %v575
    %816 = vmatpush1.bf16.msra.mxu0 %v574
    %817 = vmatprep.subr.bf16.mxu0 0
    %818 = vmatpush2.bf16.msra.mxu0 0
    %819 = vmatprep.subr.bf16.mxu0 0
    %820 = vmatpush2.bf16.msra.mxu0 0
    %821 = vmatprep.subr.bf16.mxu0 0
    %822 = vmatpush2.bf16.msra.mxu0 0
    %823 = vmatprep.subr.bf16.mxu0 0
    %824 = vmatpush2.bf16.msra.mxu0 0
    %825 = vmatprep.subr.bf16.mxu0 0
    %826 = vmatpush2.bf16.msra.mxu0 0
    %827 = vmatprep.subr.bf16.mxu0 0
    %828 = vmatpush2.bf16.msra.mxu0 0
    %829 = vmatprep.subr.bf16.mxu0 0
    %830 = vmatpush2.bf16.msra.mxu0 0
    %831 = vmatprep.subr.bf16.mxu0 0
    %832 = vmatpush2.bf16.msra.mxu0 0
    %833 = vmatprep.mubr.bf16.mxu0 0
    %834 = vmatmul.mubr.bf16.gmra.mxu0 %v676
    %v835 = vpop.f32.mrf.mxu0
    %v836 = vadd.f32 %v795, %v835
    %v837 = vpop.f32.mrf.mxu0
    %v838 = vadd.f32 %v797, %v837
    %v839 = vpop.f32.mrf.mxu0
    %v840 = vpop.f32.mrf.mxu0
    %841 = vdwg.mxu0
    %v842 = vmax.f32 %v836, 0.0
    %v843 = vmax.f32 %v838, 0.0
    %v844 = vpack.c.bf16 %v842, %v842
    %v845 = vpack.c.bf16 %v843, %v843
    %v846 = vld [vmem:[%s4] sm:$0xf]
    %v847 = vld [vmem:[%s4 + $0x4] sm:$0xf]
    %v848 = vld [vmem:[%s4 + $0x8] sm:$0xf]
    %v849 = vld [vmem:[%s4 + $0xc] sm:$0xf]
    %v850 = vld [vmem:[%s4 + $0x10] sm:$0xf]
    %v851 = vld [vmem:[%s4 + $0x14] sm:$0xf]
    %v852 = vld [vmem:[%s4 + $0x18] sm:$0xf]
    %v853 = vld [vmem:[%s4 + $0x1c] sm:$0xf]
    %v854 = vld [vmem:[%s4 + $0x20] sm:$0xf]
    %v855 = vld [vmem:[%s4 + $0x24] sm:$0xf]
    %v856 = vld [vmem:[%s4 + $0x28] sm:$0xf]
    %v857 = vld [vmem:[%s4 + $0x2c] sm:$0xf]
    %v858 = vld [vmem:[%s4 + $0x30] sm:$0xf]
    %v859 = vld [vmem:[%s4 + $0x34] sm:$0xf]
    %v860 = vld [vmem:[%s4 + $0x38] sm:$0xf]
    %v861 = vld [vmem:[%s4 + $0x3c] sm:$0xf]
    %v862 = vld [vmem:[%s4 + $0x40] sm:$0xf]
    %v863 = vld [vmem:[%s4 + $0x44] sm:$0xf]
    %v864 = vld [vmem:[%s4 + $0x48] sm:$0xf]
    %v865 = vld [vmem:[%s4 + $0x4c] sm:$0xf]
    %v866 = vld [vmem:[%s4 + $0x50] sm:$0xf]
    %v867 = vld [vmem:[%s4 + $0x54] sm:$0xf]
    %v868 = vld [vmem:[%s4 + $0x58] sm:$0xf]
    %v869 = vld [vmem:[%s4 + $0x5c] sm:$0xf]
    %v870 = vld [vmem:[%s4 + $0x60] sm:$0xf]
    %v871 = vld [vmem:[%s4 + $0x64] sm:$0xf]
    %v872 = vld [vmem:[%s4 + $0x68] sm:$0xf]
    %v873 = vld [vmem:[%s4 + $0x6c] sm:$0xf]
    %v874 = vld [vmem:[%s4 + $0x70] sm:$0xf]
    %v875 = vld [vmem:[%s4 + $0x74] sm:$0xf]
    %v876 = vld [vmem:[%s4 + $0x78] sm:$0xf]
    %v877 = vld [vmem:[%s4 + $0x7c] sm:$0xf]
    %v910 = vunpack.c.l.b16 %v846
    %v911 = vunpack.c.l.b16 %v847
    %v912 = vunpack.c.l.b16 %v848
    %v913 = vunpack.c.l.b16 %v849
    %v914 = vunpack.c.l.b16 %v850
    %v915 = vunpack.c.l.b16 %v851
    %v916 = vunpack.c.l.b16 %v852
    %v917 = vunpack.c.l.b16 %v853
    %v918 = vunpack.c.l.b16 %v854
    %v919 = vunpack.c.l.b16 %v855
    %v920 = vunpack.c.l.b16 %v856
    %v921 = vunpack.c.l.b16 %v857
    %v922 = vunpack.c.l.b16 %v858
    %v923 = vunpack.c.l.b16 %v859
    %v924 = vunpack.c.l.b16 %v860
    %v925 = vunpack.c.l.b16 %v861
    %v926 = vunpack.c.l.b16 %v862
    %v927 = vunpack.c.l.b16 %v863
    %v928 = vunpack.c.l.b16 %v864
    %v929 = vunpack.c.l.b16 %v865
    %v930 = vunpack.c.l.b16 %v866
    %v931 = vunpack.c.l.b16 %v867
    %v932 = vunpack.c.l.b16 %v868
    %v933 = vunpack.c.l.b16 %v869
    %v934 = vunpack.c.l.b16 %v870
    %v935 = vunpack.c.l.b16 %v871
    %v936 = vunpack.c.l.b16 %v872
    %v937 = vunpack.c.l.b16 %v873
    %v938 = vunpack.c.l.b16 %v874
    %v939 = vunpack.c.l.b16 %v875
    %v940 = vunpack.c.l.b16 %v876
    %v941 = vunpack.c.l.b16 %v877
    %v942 = vpack.c.b16 %v911, %v910
    %v943 = vpack.c.b16 %v913, %v912
    %v944 = vpack.c.b16 %v915, %v914
    %v945 = vpack.c.b16 %v917, %v916
    %v946 = vpack.c.b16 %v919, %v918
    %v947 = vpack.c.b16 %v921, %v920
    %v948 = vpack.c.b16 %v923, %v922
    %v949 = vpack.c.b16 %v925, %v924
    %v950 = vpack.c.b16 %v927, %v926
    %v951 = vpack.c.b16 %v929, %v928
    %v952 = vpack.c.b16 %v931, %v930
    %v953 = vpack.c.b16 %v933, %v932
    %v954 = vpack.c.b16 %v935, %v934
    %v955 = vpack.c.b16 %v937, %v936
    %v956 = vpack.c.b16 %v939, %v938
    %v957 = vpack.c.b16 %v941, %v940
    %974 = vmatprep.subr.bf16.mxu0 0
    %975 = vmatpush1.bf16.msra.mxu0 %v949
    %976 = vmatprep.subr.bf16.mxu0 0
    %977 = vmatpush1.bf16.msra.mxu0 %v948
    %978 = vmatprep.subr.bf16.mxu0 0
    %979 = vmatpush1.bf16.msra.mxu0 %v947
    %980 = vmatprep.subr.bf16.mxu0 0
    %981 = vmatpush1.bf16.msra.mxu0 %v946
    %982 = vmatprep.subr.bf16.mxu0 0
    %983 = vmatpush1.bf16.msra.mxu0 %v945
    %984 = vmatprep.subr.bf16.mxu0 0
    %985 = vmatpush1.bf16.msra.mxu0 %v944
    %986 = vmatprep.subr.bf16.mxu0 0
    %987 = vmatpush1.bf16.msra.mxu0 %v943
    %988 = vmatprep.subr.bf16.mxu0 0
    %989 = vmatpush1.bf16.msra.mxu0 %v942
    %990 = vmatprep.subr.bf16.mxu0 0
    %991 = vmatpush2.bf16.msra.mxu0 %v957
    %992 = vmatprep.subr.bf16.mxu0 0
    %993 = vmatpush2.bf16.msra.mxu0 %v956
    %994 = vmatprep.subr.bf16.mxu0 0
    %995 = vmatpush2.bf16.msra.mxu0 %v955
    %996 = vmatprep.subr.bf16.mxu0 0
    %997 = vmatpush2.bf16.msra.mxu0 %v954
    %998 = vmatprep.subr.bf16.mxu0 0
    %999 = vmatpush2.bf16.msra.mxu0 %v953
    %1000 = vmatprep.subr.bf16.mxu0 0
    %1001 = vmatpush2.bf16.msra.mxu0 %v952
    %1002 = vmatprep.subr.bf16.mxu0 0
    %1003 = vmatpush2.bf16.msra.mxu0 %v951
    %1004 = vmatprep.subr.bf16.mxu0 0
    %1005 = vmatpush2.bf16.msra.mxu0 %v950
    %1006 = vmatprep.mubr.bf16.mxu0 %v845
    %1007 = vmatmul.mubr.bf16.gmra.mxu0 %v844
    %v1008 = vpop.f32.mrf.mxu0
    %v1009 = vadd.f32 %v38, %v1008
    %v1010 = vpop.f32.mrf.mxu0
    %v1011 = vpop.f32.mrf.mxu0
    %v1012 = vpop.f32.mrf.mxu0
    %1013 = vdwg.mxu0
    %v1014 = vmax.f32 %v1009, 0.0
    %v1015 = vpack.c.bf16 %v1014, %v1014
    %v1016 = vld [vmem:[%s5] sm:$0xf]
    %v1017 = vld [vmem:[%s5 + $0x4] sm:$0xf]
    %v1018 = vld [vmem:[%s5 + $0x8] sm:$0xf]
    %v1019 = vld [vmem:[%s5 + $0xc] sm:$0xf]
    %v1020 = vld [vmem:[%s5 + $0x10] sm:$0xf]
    %v1021 = vld [vmem:[%s5 + $0x14] sm:$0xf]
    %v1022 = vld [vmem:[%s5 + $0x18] sm:$0xf]
    %v1023 = vld [vmem:[%s5 + $0x1c] sm:$0xf]
    %v1024 = vld [vmem:[%s5 + $0x20] sm:$0xf]
    %v1025 = vld [vmem:[%s5 + $0x24] sm:$0xf]
    %v1026 = vld [vmem:[%s5 + $0x28] sm:$0xf]
    %v1027 = vld [vmem:[%s5 + $0x2c] sm:$0xf]
    %v1028 = vld [vmem:[%s5 + $0x30] sm:$0xf]
    %v1029 = vld [vmem:[%s5 + $0x34] sm:$0xf]
    %v1030 = vld [vmem:[%s5 + $0x38] sm:$0xf]
    %v1031 = vld [vmem:[%s5 + $0x3c] sm:$0xf]
    %v1048 = vunpack.c.l.b16 %v1016
    %v1049 = vunpack.c.l.b16 %v1017
    %v1050 = vunpack.c.l.b16 %v1018
    %v1051 = vunpack.c.l.b16 %v1019
    %v1052 = vunpack.c.l.b16 %v1020
    %v1053 = vunpack.c.l.b16 %v1021
    %v1054 = vunpack.c.l.b16 %v1022
    %v1055 = vunpack.c.l.b16 %v1023
    %v1056 = vunpack.c.l.b16 %v1024
    %v1057 = vunpack.c.l.b16 %v1025
    %v1058 = vunpack.c.l.b16 %v1026
    %v1059 = vunpack.c.l.b16 %v1027
    %v1060 = vunpack.c.l.b16 %v1028
    %v1061 = vunpack.c.l.b16 %v1029
    %v1062 = vunpack.c.l.b16 %v1030
    %v1063 = vunpack.c.l.b16 %v1031
    %v1064 = vpack.c.b16 %v1049, %v1048
    %v1065 = vpack.c.b16 %v1051, %v1050
    %v1066 = vpack.c.b16 %v1053, %v1052
    %v1067 = vpack.c.b16 %v1055, %v1054
    %v1068 = vpack.c.b16 %v1057, %v1056
    %v1069 = vpack.c.b16 %v1059, %v1058
    %v1070 = vpack.c.b16 %v1061, %v1060
    %v1071 = vpack.c.b16 %v1063, %v1062
    %1080 = vmatprep.subr.bf16.mxu0 0
    %1081 = vmatpush1.bf16.msra.mxu0 %v1071
    %1082 = vmatprep.subr.bf16.mxu0 0
    %1083 = vmatpush1.bf16.msra.mxu0 %v1070
    %1084 = vmatprep.subr.bf16.mxu0 0
    %1085 = vmatpush1.bf16.msra.mxu0 %v1069
    %1086 = vmatprep.subr.bf16.mxu0 0
    %1087 = vmatpush1.bf16.msra.mxu0 %v1068
    %1088 = vmatprep.subr.bf16.mxu0 0
    %1089 = vmatpush1.bf16.msra.mxu0 %v1067
    %1090 = vmatprep.subr.bf16.mxu0 0
    %1091 = vmatpush1.bf16.msra.mxu0 %v1066
    %1092 = vmatprep.subr.bf16.mxu0 0
    %1093 = vmatpush1.bf16.msra.mxu0 %v1065
    %1094 = vmatprep.subr.bf16.mxu0 0
    %1095 = vmatpush1.bf16.msra.mxu0 %v1064
    %1096 = vmatprep.subr.bf16.mxu0 0
    %1097 = vmatpush2.bf16.msra.mxu0 0
    %1098 = vmatprep.subr.bf16.mxu0 0
    %1099 = vmatpush2.bf16.msra.mxu0 0
    %1100 = vmatprep.subr.bf16.mxu0 0
    %1101 = vmatpush2.bf16.msra.mxu0 0
    %1102 = vmatprep.subr.bf16.mxu0 0
    %1103 = vmatpush2.bf16.msra.mxu0 0
    %1104 = vmatprep.subr.bf16.mxu0 0
    %1105 = vmatpush2.bf16.msra.mxu0 0
    %1106 = vmatprep.subr.bf16.mxu0 0
    %1107 = vmatpush2.bf16.msra.mxu0 0
    %1108 = vmatprep.subr.bf16.mxu0 0
    %1109 = vmatpush2.bf16.msra.mxu0 0
    %1110 = vmatprep.subr.bf16.mxu0 0
    %1111 = vmatpush2.bf16.msra.mxu0 0
    %1112 = vmatprep.mubr.bf16.mxu0 0
    %1113 = vmatmul.mubr.bf16.gmra.mxu0 %v1015
    %v1114 = vpop.f32.mrf.mxu0
    %v1115 = vadd.f32 %v39, %v1114
    %v1116 = vpop.f32.mrf.mxu0
    %v1117 = vpop.f32.mrf.mxu0
    %v1118 = vpop.f32.mrf.mxu0
    %1119 = vdwg.mxu0
    %v1120 = vmul.f32 %v1115, 0.5
    %v1121 = vmul.f32 %v1120, 1.442695
    %v1122 = vpow.pop %v1121
    %v1123 = vld [vmem:[%s1] sm:$0xff]
    %1125 = vrot.lane.b32.xlu0 %v1122, 96
    %v1126 = vpop.permute.xlu0 %1125
    %v1128 = vmul.f32 %v1123, %v1126
    %v1129 = vadd.f32 %v1128, %v1115
    %v1130 = vpack.c.bf16 %v1129, %v1129
    %v1131 = vld [vmem:[%s6] sm:$0xf]
    %v1132 = vld [vmem:[%s6 + $0x4] sm:$0xf]
    %v1133 = vld [vmem:[%s6 + $0x8] sm:$0xf]
    %v1134 = vld [vmem:[%s6 + $0xc] sm:$0xf]
    %v1139 = vunpack.c.l.b16 %v1131
    %v1140 = vunpack.c.l.b16 %v1132
    %v1141 = vunpack.c.l.b16 %v1133
    %v1142 = vunpack.c.l.b16 %v1134
    %v1143 = vpack.c.b16 %v1140, %v1139
    %v1144 = vpack.c.b16 %v1142, %v1141
    %vm1147 = vcmask 261120
    %v1149 = vsel %vm1147, %v1130, 0
    %1151 = vmatprep.subr.bf16.mxu0 0
    %1152 = vmatpush1.bf16.msra.mxu0 0
    %1153 = vmatprep.subr.bf16.mxu0 0
    %1154 = vmatpush1.bf16.msra.mxu0 0
    %1155 = vmatprep.subr.bf16.mxu0 0
    %1156 = vmatpush1.bf16.msra.mxu0 0
    %1157 = vmatprep.subr.bf16.mxu0 0
    %1158 = vmatpush1.bf16.msra.mxu0 0
    %1159 = vmatprep.subr.bf16.mxu0 0
    %1160 = vmatpush1.bf16.msra.mxu0 0
    %1161 = vmatprep.subr.bf16.mxu0 0
    %1162 = vmatpush1.bf16.msra.mxu0 0
    %1163 = vmatprep.subr.bf16.mxu0 0
    %1164 = vmatpush1.bf16.msra.mxu0 %v1144
    %1165 = vmatprep.subr.bf16.mxu0 0
    %1166 = vmatpush1.bf16.msra.mxu0 %v1143
    %1167 = vmatprep.subr.bf16.mxu0 0
    %1168 = vmatpush2.bf16.msra.mxu0 0
    %1169 = vmatprep.subr.bf16.mxu0 0
    %1170 = vmatpush2.bf16.msra.mxu0 0
    %1171 = vmatprep.subr.bf16.mxu0 0
    %1172 = vmatpush2.bf16.msra.mxu0 0
    %1173 = vmatprep.subr.bf16.mxu0 0
    %1174 = vmatpush2.bf16.msra.mxu0 0
    %1175 = vmatprep.subr.bf16.mxu0 0
    %1176 = vmatpush2.bf16.msra.mxu0 0
    %1177 = vmatprep.subr.bf16.mxu0 0
    %1178 = vmatpush2.bf16.msra.mxu0 0
    %1179 = vmatprep.subr.bf16.mxu0 0
    %1180 = vmatpush2.bf16.msra.mxu0 0
    %1181 = vmatprep.subr.bf16.mxu0 0
    %1182 = vmatpush2.bf16.msra.mxu0 0
    %1183 = vmatprep.mubr.bf16.mxu0 0
    %1184 = vmatmul.mubr.bf16.gmra.mxu0 %v1149
    %v1185 = vpop.f32.mrf.mxu0
    %v1186 = vadd.f32 %v40, %v1185
    %v1187 = vpop.f32.mrf.mxu0
    %v1188 = vpop.f32.mrf.mxu0
    %v1189 = vpop.f32.mrf.mxu0
    %1190 = vdwg.mxu0
    %v1191 = vmax.f32 %v1186, 0.0
    %v1192 = vpack.c.bf16 %v1191, %v1191
    %v1193 = vld [vmem:[%s7] sm:$0xff]
    %v1194 = vld [vmem:[%s7 + $0x8] sm:$0xff]
    %v1195 = vld [vmem:[%s7 + $0x10] sm:$0xff]
    %v1196 = vld [vmem:[%s7 + $0x18] sm:$0xff]
    %v1197 = vld [vmem:[%s7 + $0x20] sm:$0xff]
    %v1198 = vld [vmem:[%s7 + $0x28] sm:$0xff]
    %v1199 = vld [vmem:[%s7 + $0x30] sm:$0xff]
    %v1200 = vld [vmem:[%s7 + $0x38] sm:$0xff]
    %v1201 = vld [vmem:[%s7 + $0x40] sm:$0xff]
    %v1202 = vld [vmem:[%s7 + $0x48] sm:$0xff]
    %v1203 = vld [vmem:[%s7 + $0x50] sm:$0xff]
    %v1204 = vld [vmem:[%s7 + $0x58] sm:$0xff]
    %v1205 = vld [vmem:[%s7 + $0x60] sm:$0xff]
    %v1206 = vld [vmem:[%s7 + $0x68] sm:$0xff]
    %v1207 = vld [vmem:[%s7 + $0x70] sm:$0xff]
    %v1208 = vld [vmem:[%s7 + $0x78] sm:$0xff]
    %v1210 = vlaneseq
    %v1211 = vshrl.u32 %v1210, 7
    %v1212 = vsub.s32 0, %v1211
    %v1213 = vrot.slane %v42, %v1212
    %v1214 = vlaneseq
    %v1215 = vshrl.u32 %v1214, 7
    %v1216 = vsub.s32 1, %v1215
    %v1217 = vrot.slane %v42, %v1216
    %v1236 = vunpack.c.l.b16 %v1193
    %v1237 = vunpack.c.h.b16 %v1193
    %v1238 = vunpack.c.l.b16 %v1194
    %v1239 = vunpack.c.h.b16 %v1194
    %v1240 = vunpack.c.l.b16 %v1195
    %v1241 = vunpack.c.h.b16 %v1195
    %v1242 = vunpack.c.l.b16 %v1196
    %v1243 = vunpack.c.h.b16 %v1196
    %v1244 = vunpack.c.l.b16 %v1197
    %v1245 = vunpack.c.h.b16 %v1197
    %v1246 = vunpack.c.l.b16 %v1198
    %v1247 = vunpack.c.h.b16 %v1198
    %v1248 = vunpack.c.l.b16 %v1199
    %v1249 = vunpack.c.h.b16 %v1199
    %v1250 = vunpack.c.l.b16 %v1200
    %v1251 = vunpack.c.h.b16 %v1200
    %v1252 = vunpack.c.l.b16 %v1201
    %v1253 = vunpack.c.h.b16 %v1201
    %v1254 = vunpack.c.l.b16 %v1202
    %v1255 = vunpack.c.h.b16 %v1202
    %v1256 = vunpack.c.l.b16 %v1203
    %v1257 = vunpack.c.h.b16 %v1203
    %v1258 = vunpack.c.l.b16 %v1204
    %v1259 = vunpack.c.h.b16 %v1204
    %v1260 = vunpack.c.l.b16 %v1205
    %v1261 = vunpack.c.h.b16 %v1205
    %v1262 = vunpack.c.l.b16 %v1206
    %v1263 = vunpack.c.h.b16 %v1206
    %v1264 = vunpack.c.l.b16 %v1207
    %v1265 = vunpack.c.h.b16 %v1207
    %v1266 = vunpack.c.l.b16 %v1208
    %v1267 = vunpack.c.h.b16 %v1208
    %v1268 = vpack.c.b16 %v1238, %v1236
    %v1269 = vpack.c.b16 %v1239, %v1237
    %v1270 = vpack.c.b16 %v1242, %v1240
    %v1271 = vpack.c.b16 %v1243, %v1241
    %v1272 = vpack.c.b16 %v1246, %v1244
    %v1273 = vpack.c.b16 %v1247, %v1245
    %v1274 = vpack.c.b16 %v1250, %v1248
    %v1275 = vpack.c.b16 %v1251, %v1249
    %v1276 = vpack.c.b16 %v1254, %v1252
    %v1277 = vpack.c.b16 %v1255, %v1253
    %v1278 = vpack.c.b16 %v1258, %v1256
    %v1279 = vpack.c.b16 %v1259, %v1257
    %v1280 = vpack.c.b16 %v1262, %v1260
    %v1281 = vpack.c.b16 %v1263, %v1261
    %v1282 = vpack.c.b16 %v1266, %v1264
    %v1283 = vpack.c.b16 %v1267, %v1265
    %1300 = vmatprep.subr.bf16.mxu0 %v1283
    %1301 = vmatpush1.bf16.msra.mxu0 %v1282
    %1302 = vmatprep.subr.bf16.mxu0 %v1281
    %1303 = vmatpush1.bf16.msra.mxu0 %v1280
    %1304 = vmatprep.subr.bf16.mxu0 %v1279
    %1305 = vmatpush1.bf16.msra.mxu0 %v1278
    %1306 = vmatprep.subr.bf16.mxu0 %v1277
    %1307 = vmatpush1.bf16.msra.mxu0 %v1276
    %1308 = vmatprep.subr.bf16.mxu0 %v1275
    %1309 = vmatpush1.bf16.msra.mxu0 %v1274
    %1310 = vmatprep.subr.bf16.mxu0 %v1273
    %1311 = vmatpush1.bf16.msra.mxu0 %v1272
    %1312 = vmatprep.subr.bf16.mxu0 %v1271
    %1313 = vmatpush1.bf16.msra.mxu0 %v1270
    %1314 = vmatprep.subr.bf16.mxu0 %v1269
    %1315 = vmatpush1.bf16.msra.mxu0 %v1268
    %1316 = vmatprep.subr.bf16.mxu0 0
    %1317 = vmatpush2.bf16.msra.mxu0 0
    %1318 = vmatprep.subr.bf16.mxu0 0
    %1319 = vmatpush2.bf16.msra.mxu0 0
    %1320 = vmatprep.subr.bf16.mxu0 0
    %1321 = vmatpush2.bf16.msra.mxu0 0
    %1322 = vmatprep.subr.bf16.mxu0 0
    %1323 = vmatpush2.bf16.msra.mxu0 0
    %1324 = vmatprep.subr.bf16.mxu0 0
    %1325 = vmatpush2.bf16.msra.mxu0 0
    %1326 = vmatprep.subr.bf16.mxu0 0
    %1327 = vmatpush2.bf16.msra.mxu0 0
    %1328 = vmatprep.subr.bf16.mxu0 0
    %1329 = vmatpush2.bf16.msra.mxu0 0
    %1330 = vmatprep.subr.bf16.mxu0 0
    %1331 = vmatpush2.bf16.msra.mxu0 0
    %1332 = vmatprep.mubr.bf16.mxu0 0
    %1333 = vmatmul.mubr.bf16.gmra.mxu0 %v1192
    %v1334 = vpop.f32.mrf.mxu0
    %v1335 = vadd.f32 %v1213, %v1334
    %v1336 = vpop.f32.mrf.mxu0
    %v1337 = vadd.f32 %v1217, %v1336
    %v1338 = vpop.f32.mrf.mxu0
    %v1339 = vpop.f32.mrf.mxu0
    %1340 = vdwg.mxu0
    %v1341 = vmax.f32 %v1335, 0.0
    %v1342 = vmax.f32 %v1337, 0.0
    %v1343 = vpack.c.bf16 %v1341, %v1341
    %v1344 = vpack.c.bf16 %v1342, %v1342
    %v1345 = vld [vmem:[%s8] sm:$0xff]
    %v1346 = vld [vmem:[%s8 + $0x8] sm:$0xff]
    %v1347 = vld [vmem:[%s8 + $0x10] sm:$0xff]
    %v1348 = vld [vmem:[%s8 + $0x18] sm:$0xf]
    %v1349 = vld [vmem:[%s8 + $0x1c] sm:$0xff]
    %v1350 = vld [vmem:[%s8 + $0x24] sm:$0xff]
    %v1351 = vld [vmem:[%s8 + $0x2c] sm:$0xff]
    %v1352 = vld [vmem:[%s8 + $0x34] sm:$0xf]
    %v1353 = vld [vmem:[%s8 + $0x38] sm:$0xff]
    %v1354 = vld [vmem:[%s8 + $0x40] sm:$0xff]
    %v1355 = vld [vmem:[%s8 + $0x48] sm:$0xff]
    %v1356 = vld [vmem:[%s8 + $0x50] sm:$0xf]
    %v1357 = vld [vmem:[%s8 + $0x54] sm:$0xff]
    %v1358 = vld [vmem:[%s8 + $0x5c] sm:$0xff]
    %v1359 = vld [vmem:[%s8 + $0x64] sm:$0xff]
    %v1360 = vld [vmem:[%s8 + $0x6c] sm:$0xf]
    %v1361 = vld [vmem:[%s8 + $0x70] sm:$0xff]
    %v1362 = vld [vmem:[%s8 + $0x78] sm:$0xff]
    %v1363 = vld [vmem:[%s8 + $0x80] sm:$0xff]
    %v1364 = vld [vmem:[%s8 + $0x88] sm:$0xf]
    %v1365 = vld [vmem:[%s8 + $0x8c] sm:$0xff]
    %v1366 = vld [vmem:[%s8 + $0x94] sm:$0xff]
    %v1367 = vld [vmem:[%s8 + $0x9c] sm:$0xff]
    %v1368 = vld [vmem:[%s8 + $0xa4] sm:$0xf]
    %v1369 = vld [vmem:[%s8 + $0xa8] sm:$0xff]
    %v1370 = vld [vmem:[%s8 + $0xb0] sm:$0xff]
    %v1371 = vld [vmem:[%s8 + $0xb8] sm:$0xff]
    %v1372 = vld [vmem:[%s8 + $0xc0] sm:$0xf]
    %v1373 = vld [vmem:[%s8 + $0xc4] sm:$0xff]
    %v1374 = vld [vmem:[%s8 + $0xcc] sm:$0xff]
    %v1375 = vld [vmem:[%s8 + $0xd4] sm:$0xff]
    %v1376 = vld [vmem:[%s8 + $0xdc] sm:$0xf]
    %v1377 = vld [vmem:[%s8 + $0xe0] sm:$0xff]
    %v1378 = vld [vmem:[%s8 + $0xe8] sm:$0xff]
    %v1379 = vld [vmem:[%s8 + $0xf0] sm:$0xff]
    %v1380 = vld [vmem:[%s8 + $0xf8] sm:$0xf]
    %v1381 = vld [vmem:[%s8 + $0xfc] sm:$0xff]
    %v1382 = vld [vmem:[%s8 + $0x104] sm:$0xff]
    %v1383 = vld [vmem:[%s8 + $0x10c] sm:$0xff]
    %v1384 = vld [vmem:[%s8 + $0x114] sm:$0xf]
    %v1385 = vld [vmem:[%s8 + $0x118] sm:$0xff]
    %v1386 = vld [vmem:[%s8 + $0x120] sm:$0xff]
    %v1387 = vld [vmem:[%s8 + $0x128] sm:$0xff]
    %v1388 = vld [vmem:[%s8 + $0x130] sm:$0xf]
    %v1389 = vld [vmem:[%s8 + $0x134] sm:$0xff]
    %v1390 = vld [vmem:[%s8 + $0x13c] sm:$0xff]
    %v1391 = vld [vmem:[%s8 + $0x144] sm:$0xff]
    %v1392 = vld [vmem:[%s8 + $0x14c] sm:$0xf]
    %v1393 = vld [vmem:[%s8 + $0x150] sm:$0xff]
    %v1394 = vld [vmem:[%s8 + $0x158] sm:$0xff]
    %v1395 = vld [vmem:[%s8 + $0x160] sm:$0xff]
    %v1396 = vld [vmem:[%s8 + $0x168] sm:$0xf]
    %v1397 = vld [vmem:[%s8 + $0x16c] sm:$0xff]
    %v1398 = vld [vmem:[%s8 + $0x174] sm:$0xff]
    %v1399 = vld [vmem:[%s8 + $0x17c] sm:$0xff]
    %v1400 = vld [vmem:[%s8 + $0x184] sm:$0xf]
    %v1401 = vld [vmem:[%s8 + $0x188] sm:$0xff]
    %v1402 = vld [vmem:[%s8 + $0x190] sm:$0xff]
    %v1403 = vld [vmem:[%s8 + $0x198] sm:$0xff]
    %v1404 = vld [vmem:[%s8 + $0x1a0] sm:$0xf]
    %v1405 = vld [vmem:[%s8 + $0x1a4] sm:$0xff]
    %v1406 = vld [vmem:[%s8 + $0x1ac] sm:$0xff]
    %v1407 = vld [vmem:[%s8 + $0x1b4] sm:$0xff]
    %v1408 = vld [vmem:[%s8 + $0x1bc] sm:$0xf]
    %v1409 = vld [vmem:[%s8 + $0x1c0] sm:$0xff]
    %v1410 = vld [vmem:[%s8 + $0x1c8] sm:$0xff]
    %v1411 = vld [vmem:[%s8 + $0x1d0] sm:$0xff]
    %v1412 = vld [vmem:[%s8 + $0x1d8] sm:$0xf]
    %v1413 = vld [vmem:[%s8 + $0x1dc] sm:$0xff]
    %v1414 = vld [vmem:[%s8 + $0x1e4] sm:$0xff]
    %v1415 = vld [vmem:[%s8 + $0x1ec] sm:$0xff]
    %v1416 = vld [vmem:[%s8 + $0x1f4] sm:$0xf]
    %v1417 = vld [vmem:[%s8 + $0x1f8] sm:$0xff]
    %v1418 = vld [vmem:[%s8 + $0x200] sm:$0xff]
    %v1419 = vld [vmem:[%s8 + $0x208] sm:$0xff]
    %v1420 = vld [vmem:[%s8 + $0x210] sm:$0xf]
    %v1421 = vld [vmem:[%s8 + $0x214] sm:$0xff]
    %v1422 = vld [vmem:[%s8 + $0x21c] sm:$0xff]
    %v1423 = vld [vmem:[%s8 + $0x224] sm:$0xff]
    %v1424 = vld [vmem:[%s8 + $0x22c] sm:$0xf]
    %v1425 = vld [vmem:[%s8 + $0x230] sm:$0xff]
    %v1426 = vld [vmem:[%s8 + $0x238] sm:$0xff]
    %v1427 = vld [vmem:[%s8 + $0x240] sm:$0xff]
    %v1428 = vld [vmem:[%s8 + $0x248] sm:$0xf]
    %v1429 = vld [vmem:[%s8 + $0x24c] sm:$0xff]
    %v1430 = vld [vmem:[%s8 + $0x254] sm:$0xff]
    %v1431 = vld [vmem:[%s8 + $0x25c] sm:$0xff]
    %v1432 = vld [vmem:[%s8 + $0x264] sm:$0xf]
    %v1433 = vld [vmem:[%s8 + $0x268] sm:$0xff]
    %v1434 = vld [vmem:[%s8 + $0x270] sm:$0xff]
    %v1435 = vld [vmem:[%s8 + $0x278] sm:$0xff]
    %v1436 = vld [vmem:[%s8 + $0x280] sm:$0xf]
    %v1437 = vld [vmem:[%s8 + $0x284] sm:$0xff]
    %v1438 = vld [vmem:[%s8 + $0x28c] sm:$0xff]
    %v1439 = vld [vmem:[%s8 + $0x294] sm:$0xff]
    %v1440 = vld [vmem:[%s8 + $0x29c] sm:$0xf]
    %v1441 = vld [vmem:[%s8 + $0x2a0] sm:$0xff]
    %v1442 = vld [vmem:[%s8 + $0x2a8] sm:$0xff]
    %v1443 = vld [vmem:[%s8 + $0x2b0] sm:$0xff]
    %v1444 = vld [vmem:[%s8 + $0x2b8] sm:$0xf]
    %v1445 = vld [vmem:[%s8 + $0x2bc] sm:$0xff]
    %v1446 = vld [vmem:[%s8 + $0x2c4] sm:$0xff]
    %v1447 = vld [vmem:[%s8 + $0x2cc] sm:$0xff]
    %v1448 = vld [vmem:[%s8 + $0x2d4] sm:$0xf]
    %v1449 = vld [vmem:[%s8 + $0x2d8] sm:$0xff]
    %v1450 = vld [vmem:[%s8 + $0x2e0] sm:$0xff]
    %v1451 = vld [vmem:[%s8 + $0x2e8] sm:$0xff]
    %v1452 = vld [vmem:[%s8 + $0x2f0] sm:$0xf]
    %v1453 = vld [vmem:[%s8 + $0x2f4] sm:$0xff]
    %v1454 = vld [vmem:[%s8 + $0x2fc] sm:$0xff]
    %v1455 = vld [vmem:[%s8 + $0x304] sm:$0xff]
    %v1456 = vld [vmem:[%s8 + $0x30c] sm:$0xf]
    %v1457 = vld [vmem:[%s8 + $0x310] sm:$0xff]
    %v1458 = vld [vmem:[%s8 + $0x318] sm:$0xff]
    %v1459 = vld [vmem:[%s8 + $0x320] sm:$0xff]
    %v1460 = vld [vmem:[%s8 + $0x328] sm:$0xf]
    %v1461 = vld [vmem:[%s8 + $0x32c] sm:$0xff]
    %v1462 = vld [vmem:[%s8 + $0x334] sm:$0xff]
    %v1463 = vld [vmem:[%s8 + $0x33c] sm:$0xff]
    %v1464 = vld [vmem:[%s8 + $0x344] sm:$0xf]
    %v1465 = vld [vmem:[%s8 + $0x348] sm:$0xff]
    %v1466 = vld [vmem:[%s8 + $0x350] sm:$0xff]
    %v1467 = vld [vmem:[%s8 + $0x358] sm:$0xff]
    %v1468 = vld [vmem:[%s8 + $0x360] sm:$0xf]
    %v1469 = vld [vmem:[%s8 + $0x364] sm:$0xff]
    %v1470 = vld [vmem:[%s8 + $0x36c] sm:$0xff]
    %v1471 = vld [vmem:[%s8 + $0x374] sm:$0xff]
    %v1472 = vld [vmem:[%s8 + $0x37c] sm:$0xf]
    %v1474 = vlaneseq
    %v1475 = vshrl.u32 %v1474, 7
    %v1476 = vsub.s32 0, %v1475
    %v1477 = vrot.slane %v46, %v1476
    %v1478 = vlaneseq
    %v1479 = vshrl.u32 %v1478, 7
    %v1480 = vsub.s32 1, %v1479
    %v1481 = vrot.slane %v46, %v1480
    %v1482 = vlaneseq
    %v1483 = vshrl.u32 %v1482, 7
    %v1484 = vsub.s32 2, %v1483
    %v1485 = vrot.slane %v46, %v1484
    %v1486 = vlaneseq
    %v1487 = vshrl.u32 %v1486, 7
    %v1488 = vsub.s32 3, %v1487
    %v1489 = vrot.slane %v46, %v1488
    %v1490 = vlaneseq
    %v1491 = vshrl.u32 %v1490, 7
    %v1492 = vsub.s32 4, %v1491
    %v1493 = vrot.slane %v46, %v1492
    %v1494 = vlaneseq
    %v1495 = vshrl.u32 %v1494, 7
    %v1496 = vsub.s32 5, %v1495
    %v1497 = vrot.slane %v46, %v1496
    %v1498 = vlaneseq
    %v1499 = vshrl.u32 %v1498, 7
    %v1500 = vsub.s32 6, %v1499
    %v1501 = vrot.slane %v46, %v1500
    %v1637 = vunpack.c.l.b16 %v1345
    %v1638 = vunpack.c.h.b16 %v1345
    %v1639 = vunpack.c.l.b16 %v1346
    %v1640 = vunpack.c.h.b16 %v1346
    %v1641 = vunpack.c.l.b16 %v1347
    %v1642 = vunpack.c.h.b16 %v1347
    %v1643 = vunpack.c.l.b16 %v1348
    %v1644 = vunpack.c.l.b16 %v1349
    %v1645 = vunpack.c.h.b16 %v1349
    %v1646 = vunpack.c.l.b16 %v1350
    %v1647 = vunpack.c.h.b16 %v1350
    %v1648 = vunpack.c.l.b16 %v1351
    %v1649 = vunpack.c.h.b16 %v1351
    %v1650 = vunpack.c.l.b16 %v1352
    %v1651 = vunpack.c.l.b16 %v1353
    %v1652 = vunpack.c.h.b16 %v1353
    %v1653 = vunpack.c.l.b16 %v1354
    %v1654 = vunpack.c.h.b16 %v1354
    %v1655 = vunpack.c.l.b16 %v1355
    %v1656 = vunpack.c.h.b16 %v1355
    %v1657 = vunpack.c.l.b16 %v1356
    %v1658 = vunpack.c.l.b16 %v1357
    %v1659 = vunpack.c.h.b16 %v1357
    %v1660 = vunpack.c.l.b16 %v1358
    %v1661 = vunpack.c.h.b16 %v1358
    %v1662 = vunpack.c.l.b16 %v1359
    %v1663 = vunpack.c.h.b16 %v1359
    %v1664 = vunpack.c.l.b16 %v1360
    %v1665 = vunpack.c.l.b16 %v1361
    %v1666 = vunpack.c.h.b16 %v1361
    %v1667 = vunpack.c.l.b16 %v1362
    %v1668 = vunpack.c.h.b16 %v1362
    %v1669 = vunpack.c.l.b16 %v1363
    %v1670 = vunpack.c.h.b16 %v1363
    %v1671 = vunpack.c.l.b16 %v1364
    %v1672 = vunpack.c.l.b16 %v1365
    %v1673 = vunpack.c.h.b16 %v1365
    %v1674 = vunpack.c.l.b16 %v1366
    %v1675 = vunpack.c.h.b16 %v1366
    %v1676 = vunpack.c.l.b16 %v1367
    %v1677 = vunpack.c.h.b16 %v1367
    %v1678 = vunpack.c.l.b16 %v1368
    %v1679 = vunpack.c.l.b16 %v1369
    %v1680 = vunpack.c.h.b16 %v1369
    %v1681 = vunpack.c.l.b16 %v1370
    %v1682 = vunpack.c.h.b16 %v1370
    %v1683 = vunpack.c.l.b16 %v1371
    %v1684 = vunpack.c.h.b16 %v1371
    %v1685 = vunpack.c.l.b16 %v1372
    %v1686 = vunpack.c.l.b16 %v1373
    %v1687 = vunpack.c.h.b16 %v1373
    %v1688 = vunpack.c.l.b16 %v1374
    %v1689 = vunpack.c.h.b16 %v1374
    %v1690 = vunpack.c.l.b16 %v1375
    %v1691 = vunpack.c.h.b16 %v1375
    %v1692 = vunpack.c.l.b16 %v1376
    %v1693 = vunpack.c.l.b16 %v1377
    %v1694 = vunpack.c.h.b16 %v1377
    %v1695 = vunpack.c.l.b16 %v1378
    %v1696 = vunpack.c.h.b16 %v1378
    %v1697 = vunpack.c.l.b16 %v1379
    %v1698 = vunpack.c.h.b16 %v1379
    %v1699 = vunpack.c.l.b16 %v1380
    %v1700 = vunpack.c.l.b16 %v1381
    %v1701 = vunpack.c.h.b16 %v1381
    %v1702 = vunpack.c.l.b16 %v1382
    %v1703 = vunpack.c.h.b16 %v1382
    %v1704 = vunpack.c.l.b16 %v1383
    %v1705 = vunpack.c.h.b16 %v1383
    %v1706 = vunpack.c.l.b16 %v1384
    %v1707 = vunpack.c.l.b16 %v1385
    %v1708 = vunpack.c.h.b16 %v1385
    %v1709 = vunpack.c.l.b16 %v1386
    %v1710 = vunpack.c.h.b16 %v1386
    %v1711 = vunpack.c.l.b16 %v1387
    %v1712 = vunpack.c.h.b16 %v1387
    %v1713 = vunpack.c.l.b16 %v1388
    %v1714 = vunpack.c.l.b16 %v1389
    %v1715 = vunpack.c.h.b16 %v1389
    %v1716 = vunpack.c.l.b16 %v1390
    %v1717 = vunpack.c.h.b16 %v1390
    %v1718 = vunpack.c.l.b16 %v1391
    %v1719 = vunpack.c.h.b16 %v1391
    %v1720 = vunpack.c.l.b16 %v1392
    %v1721 = vunpack.c.l.b16 %v1393
    %v1722 = vunpack.c.h.b16 %v1393
    %v1723 = vunpack.c.l.b16 %v1394
    %v1724 = vunpack.c.h.b16 %v1394
    %v1725 = vunpack.c.l.b16 %v1395
    %v1726 = vunpack.c.h.b16 %v1395
    %v1727 = vunpack.c.l.b16 %v1396
    %v1728 = vunpack.c.l.b16 %v1397
    %v1729 = vunpack.c.h.b16 %v1397
    %v1730 = vunpack.c.l.b16 %v1398
    %v1731 = vunpack.c.h.b16 %v1398
    %v1732 = vunpack.c.l.b16 %v1399
    %v1733 = vunpack.c.h.b16 %v1399
    %v1734 = vunpack.c.l.b16 %v1400
    %v1735 = vunpack.c.l.b16 %v1401
    %v1736 = vunpack.c.h.b16 %v1401
    %v1737 = vunpack.c.l.b16 %v1402
    %v1738 = vunpack.c.h.b16 %v1402
    %v1739 = vunpack.c.l.b16 %v1403
    %v1740 = vunpack.c.h.b16 %v1403
    %v1741 = vunpack.c.l.b16 %v1404
    %v1742 = vunpack.c.l.b16 %v1405
    %v1743 = vunpack.c.h.b16 %v1405
    %v1744 = vunpack.c.l.b16 %v1406
    %v1745 = vunpack.c.h.b16 %v1406
    %v1746 = vunpack.c.l.b16 %v1407
    %v1747 = vunpack.c.h.b16 %v1407
    %v1748 = vunpack.c.l.b16 %v1408
    %v1749 = vunpack.c.l.b16 %v1409
    %v1750 = vunpack.c.h.b16 %v1409
    %v1751 = vunpack.c.l.b16 %v1410
    %v1752 = vunpack.c.h.b16 %v1410
    %v1753 = vunpack.c.l.b16 %v1411
    %v1754 = vunpack.c.h.b16 %v1411
    %v1755 = vunpack.c.l.b16 %v1412
    %v1756 = vunpack.c.l.b16 %v1413
    %v1757 = vunpack.c.h.b16 %v1413
    %v1758 = vunpack.c.l.b16 %v1414
    %v1759 = vunpack.c.h.b16 %v1414
    %v1760 = vunpack.c.l.b16 %v1415
    %v1761 = vunpack.c.h.b16 %v1415
    %v1762 = vunpack.c.l.b16 %v1416
    %v1763 = vunpack.c.l.b16 %v1417
    %v1764 = vunpack.c.h.b16 %v1417
    %v1765 = vunpack.c.l.b16 %v1418
    %v1766 = vunpack.c.h.b16 %v1418
    %v1767 = vunpack.c.l.b16 %v1419
    %v1768 = vunpack.c.h.b16 %v1419
    %v1769 = vunpack.c.l.b16 %v1420
    %v1770 = vunpack.c.l.b16 %v1421
    %v1771 = vunpack.c.h.b16 %v1421
    %v1772 = vunpack.c.l.b16 %v1422
    %v1773 = vunpack.c.h.b16 %v1422
    %v1774 = vunpack.c.l.b16 %v1423
    %v1775 = vunpack.c.h.b16 %v1423
    %v1776 = vunpack.c.l.b16 %v1424
    %v1777 = vunpack.c.l.b16 %v1425
    %v1778 = vunpack.c.h.b16 %v1425
    %v1779 = vunpack.c.l.b16 %v1426
    %v1780 = vunpack.c.h.b16 %v1426
    %v1781 = vunpack.c.l.b16 %v1427
    %v1782 = vunpack.c.h.b16 %v1427
    %v1783 = vunpack.c.l.b16 %v1428
    %v1784 = vunpack.c.l.b16 %v1429
    %v1785 = vunpack.c.h.b16 %v1429
    %v1786 = vunpack.c.l.b16 %v1430
    %v1787 = vunpack.c.h.b16 %v1430
    %v1788 = vunpack.c.l.b16 %v1431
    %v1789 = vunpack.c.h.b16 %v1431
    %v1790 = vunpack.c.l.b16 %v1432
    %v1791 = vunpack.c.l.b16 %v1433
    %v1792 = vunpack.c.h.b16 %v1433
    %v1793 = vunpack.c.l.b16 %v1434
    %v1794 = vunpack.c.h.b16 %v1434
    %v1795 = vunpack.c.l.b16 %v1435
    %v1796 = vunpack.c.h.b16 %v1435
    %v1797 = vunpack.c.l.b16 %v1436
    %v1798 = vunpack.c.l.b16 %v1437
    %v1799 = vunpack.c.h.b16 %v1437
    %v1800 = vunpack.c.l.b16 %v1438
    %v1801 = vunpack.c.h.b16 %v1438
    %v1802 = vunpack.c.l.b16 %v1439
    %v1803 = vunpack.c.h.b16 %v1439
    %v1804 = vunpack.c.l.b16 %v1440
    %v1805 = vunpack.c.l.b16 %v1441
    %v1806 = vunpack.c.h.b16 %v1441
    %v1807 = vunpack.c.l.b16 %v1442
    %v1808 = vunpack.c.h.b16 %v1442
    %v1809 = vunpack.c.l.b16 %v1443
    %v1810 = vunpack.c.h.b16 %v1443
    %v1811 = vunpack.c.l.b16 %v1444
    %v1812 = vunpack.c.l.b16 %v1445
    %v1813 = vunpack.c.h.b16 %v1445
    %v1814 = vunpack.c.l.b16 %v1446
    %v1815 = vunpack.c.h.b16 %v1446
    %v1816 = vunpack.c.l.b16 %v1447
    %v1817 = vunpack.c.h.b16 %v1447
    %v1818 = vunpack.c.l.b16 %v1448
    %v1819 = vunpack.c.l.b16 %v1449
    %v1820 = vunpack.c.h.b16 %v1449
    %v1821 = vunpack.c.l.b16 %v1450
    %v1822 = vunpack.c.h.b16 %v1450
    %v1823 = vunpack.c.l.b16 %v1451
    %v1824 = vunpack.c.h.b16 %v1451
    %v1825 = vunpack.c.l.b16 %v1452
    %v1826 = vunpack.c.l.b16 %v1453
    %v1827 = vunpack.c.h.b16 %v1453
    %v1828 = vunpack.c.l.b16 %v1454
    %v1829 = vunpack.c.h.b16 %v1454
    %v1830 = vunpack.c.l.b16 %v1455
    %v1831 = vunpack.c.h.b16 %v1455
    %v1832 = vunpack.c.l.b16 %v1456
    %v1833 = vunpack.c.l.b16 %v1457
    %v1834 = vunpack.c.h.b16 %v1457
    %v1835 = vunpack.c.l.b16 %v1458
    %v1836 = vunpack.c.h.b16 %v1458
    %v1837 = vunpack.c.l.b16 %v1459
    %v1838 = vunpack.c.h.b16 %v1459
    %v1839 = vunpack.c.l.b16 %v1460
    %v1840 = vunpack.c.l.b16 %v1461
    %v1841 = vunpack.c.h.b16 %v1461
    %v1842 = vunpack.c.l.b16 %v1462
    %v1843 = vunpack.c.h.b16 %v1462
    %v1844 = vunpack.c.l.b16 %v1463
    %v1845 = vunpack.c.h.b16 %v1463
    %v1846 = vunpack.c.l.b16 %v1464
    %v1847 = vunpack.c.l.b16 %v1465
    %v1848 = vunpack.c.h.b16 %v1465
    %v1849 = vunpack.c.l.b16 %v1466
    %v1850 = vunpack.c.h.b16 %v1466
    %v1851 = vunpack.c.l.b16 %v1467
    %v1852 = vunpack.c.h.b16 %v1467
    %v1853 = vunpack.c.l.b16 %v1468
    %v1854 = vunpack.c.l.b16 %v1469
    %v1855 = vunpack.c.h.b16 %v1469
    %v1856 = vunpack.c.l.b16 %v1470
    %v1857 = vunpack.c.h.b16 %v1470
    %v1858 = vunpack.c.l.b16 %v1471
    %v1859 = vunpack.c.h.b16 %v1471
    %v1860 = vunpack.c.l.b16 %v1472
    %v1861 = vpack.c.b16 %v1644, %v1637
    %v1862 = vpack.c.b16 %v1645, %v1638
    %v1863 = vpack.c.b16 %v1646, %v1639
    %v1864 = vpack.c.b16 %v1647, %v1640
    %v1865 = vpack.c.b16 %v1648, %v1641
    %v1866 = vpack.c.b16 %v1649, %v1642
    %v1867 = vpack.c.b16 %v1650, %v1643
    %v1868 = vpack.c.b16 %v1658, %v1651
    %v1869 = vpack.c.b16 %v1659, %v1652
    %v1870 = vpack.c.b16 %v1660, %v1653
    %v1871 = vpack.c.b16 %v1661, %v1654
    %v1872 = vpack.c.b16 %v1662, %v1655
    %v1873 = vpack.c.b16 %v1663, %v1656
    %v1874 = vpack.c.b16 %v1664, %v1657
    %v1875 = vpack.c.b16 %v1672, %v1665
    %v1876 = vpack.c.b16 %v1673, %v1666
    %v1877 = vpack.c.b16 %v1674, %v1667
    %v1878 = vpack.c.b16 %v1675, %v1668
    %v1879 = vpack.c.b16 %v1676, %v1669
    %v1880 = vpack.c.b16 %v1677, %v1670
    %v1881 = vpack.c.b16 %v1678, %v1671
    %v1882 = vpack.c.b16 %v1686, %v1679
    %v1883 = vpack.c.b16 %v1687, %v1680
    %v1884 = vpack.c.b16 %v1688, %v1681
    %v1885 = vpack.c.b16 %v1689, %v1682
    %v1886 = vpack.c.b16 %v1690, %v1683
    %v1887 = vpack.c.b16 %v1691, %v1684
    %v1888 = vpack.c.b16 %v1692, %v1685
    %v1889 = vpack.c.b16 %v1700, %v1693
    %v1890 = vpack.c.b16 %v1701, %v1694
    %v1891 = vpack.c.b16 %v1702, %v1695
    %v1892 = vpack.c.b16 %v1703, %v1696
    %v1893 = vpack.c.b16 %v1704, %v1697
    %v1894 = vpack.c.b16 %v1705, %v1698
    %v1895 = vpack.c.b16 %v1706, %v1699
    %v1896 = vpack.c.b16 %v1714, %v1707
    %v1897 = vpack.c.b16 %v1715, %v1708
    %v1898 = vpack.c.b16 %v1716, %v1709
    %v1899 = vpack.c.b16 %v1717, %v1710
    %v1900 = vpack.c.b16 %v1718, %v1711
    %v1901 = vpack.c.b16 %v1719, %v1712
    %v1902 = vpack.c.b16 %v1720, %v1713
    %v1903 = vpack.c.b16 %v1728, %v1721
    %v1904 = vpack.c.b16 %v1729, %v1722
    %v1905 = vpack.c.b16 %v1730, %v1723
    %v1906 = vpack.c.b16 %v1731, %v1724
    %v1907 = vpack.c.b16 %v1732, %v1725
    %v1908 = vpack.c.b16 %v1733, %v1726
    %v1909 = vpack.c.b16 %v1734, %v1727
    %v1910 = vpack.c.b16 %v1742, %v1735
    %v1911 = vpack.c.b16 %v1743, %v1736
    %v1912 = vpack.c.b16 %v1744, %v1737
    %v1913 = vpack.c.b16 %v1745, %v1738
    %v1914 = vpack.c.b16 %v1746, %v1739
    %v1915 = vpack.c.b16 %v1747, %v1740
    %v1916 = vpack.c.b16 %v1748, %v1741
    %v1917 = vpack.c.b16 %v1756, %v1749
    %v1918 = vpack.c.b16 %v1757, %v1750
    %v1919 = vpack.c.b16 %v1758, %v1751
    %v1920 = vpack.c.b16 %v1759, %v1752
    %v1921 = vpack.c.b16 %v1760, %v1753
    %v1922 = vpack.c.b16 %v1761, %v1754
    %v1923 = vpack.c.b16 %v1762, %v1755
    %v1924 = vpack.c.b16 %v1770, %v1763
    %v1925 = vpack.c.b16 %v1771, %v1764
    %v1926 = vpack.c.b16 %v1772, %v1765
    %v1927 = vpack.c.b16 %v1773, %v1766
    %v1928 = vpack.c.b16 %v1774, %v1767
    %v1929 = vpack.c.b16 %v1775, %v1768
    %v1930 = vpack.c.b16 %v1776, %v1769
    %v1931 = vpack.c.b16 %v1784, %v1777
    %v1932 = vpack.c.b16 %v1785, %v1778
    %v1933 = vpack.c.b16 %v1786, %v1779
    %v1934 = vpack.c.b16 %v1787, %v1780
    %v1935 = vpack.c.b16 %v1788, %v1781
    %v1936 = vpack.c.b16 %v1789, %v1782
    %v1937 = vpack.c.b16 %v1790, %v1783
    %v1938 = vpack.c.b16 %v1798, %v1791
    %v1939 = vpack.c.b16 %v1799, %v1792
    %v1940 = vpack.c.b16 %v1800, %v1793
    %v1941 = vpack.c.b16 %v1801, %v1794
    %v1942 = vpack.c.b16 %v1802, %v1795
    %v1943 = vpack.c.b16 %v1803, %v1796
    %v1944 = vpack.c.b16 %v1804, %v1797
    %v1945 = vpack.c.b16 %v1812, %v1805
    %v1946 = vpack.c.b16 %v1813, %v1806
    %v1947 = vpack.c.b16 %v1814, %v1807
    %v1948 = vpack.c.b16 %v1815, %v1808
    %v1949 = vpack.c.b16 %v1816, %v1809
    %v1950 = vpack.c.b16 %v1817, %v1810
    %v1951 = vpack.c.b16 %v1818, %v1811
    %v1952 = vpack.c.b16 %v1826, %v1819
    %v1953 = vpack.c.b16 %v1827, %v1820
    %v1954 = vpack.c.b16 %v1828, %v1821
    %v1955 = vpack.c.b16 %v1829, %v1822
    %v1956 = vpack.c.b16 %v1830, %v1823
    %v1957 = vpack.c.b16 %v1831, %v1824
    %v1958 = vpack.c.b16 %v1832, %v1825
    %v1959 = vpack.c.b16 %v1840, %v1833
    %v1960 = vpack.c.b16 %v1841, %v1834
    %v1961 = vpack.c.b16 %v1842, %v1835
    %v1962 = vpack.c.b16 %v1843, %v1836
    %v1963 = vpack.c.b16 %v1844, %v1837
    %v1964 = vpack.c.b16 %v1845, %v1838
    %v1965 = vpack.c.b16 %v1846, %v1839
    %v1966 = vpack.c.b16 %v1854, %v1847
    %v1967 = vpack.c.b16 %v1855, %v1848
    %v1968 = vpack.c.b16 %v1856, %v1849
    %v1969 = vpack.c.b16 %v1857, %v1850
    %v1970 = vpack.c.b16 %v1858, %v1851
    %v1971 = vpack.c.b16 %v1859, %v1852
    %v1972 = vpack.c.b16 %v1860, %v1853
    %2085 = vmatprep.subr.bf16.mxu0 %v1911
    %2086 = vmatpush1.bf16.msra.mxu0 %v1910
    %2087 = vmatprep.subr.bf16.mxu0 %v1904
    %2088 = vmatpush1.bf16.msra.mxu0 %v1903
    %2089 = vmatprep.subr.bf16.mxu0 %v1897
    %2090 = vmatpush1.bf16.msra.mxu0 %v1896
    %2091 = vmatprep.subr.bf16.mxu0 %v1890
    %2092 = vmatpush1.bf16.msra.mxu0 %v1889
    %2093 = vmatprep.subr.bf16.mxu0 %v1883
    %2094 = vmatpush1.bf16.msra.mxu0 %v1882
    %2095 = vmatprep.subr.bf16.mxu0 %v1876
    %2096 = vmatpush1.bf16.msra.mxu0 %v1875
    %2097 = vmatprep.subr.bf16.mxu0 %v1869
    %2098 = vmatpush1.bf16.msra.mxu0 %v1868
    %2099 = vmatprep.subr.bf16.mxu0 %v1862
    %2100 = vmatpush1.bf16.msra.mxu0 %v1861
    %2101 = vmatprep.subr.bf16.mxu0 %v1967
    %2102 = vmatpush2.bf16.msra.mxu0 %v1966
    %2103 = vmatprep.subr.bf16.mxu0 %v1960
    %2104 = vmatpush2.bf16.msra.mxu0 %v1959
    %2105 = vmatprep.subr.bf16.mxu0 %v1953
    %2106 = vmatpush2.bf16.msra.mxu0 %v1952
    %2107 = vmatprep.subr.bf16.mxu0 %v1946
    %2108 = vmatpush2.bf16.msra.mxu0 %v1945
    %2109 = vmatprep.subr.bf16.mxu0 %v1939
    %2110 = vmatpush2.bf16.msra.mxu0 %v1938
    %2111 = vmatprep.subr.bf16.mxu0 %v1932
    %2112 = vmatpush2.bf16.msra.mxu0 %v1931
    %2113 = vmatprep.subr.bf16.mxu0 %v1925
    %2114 = vmatpush2.bf16.msra.mxu0 %v1924
    %2115 = vmatprep.subr.bf16.mxu0 %v1918
    %2116 = vmatpush2.bf16.msra.mxu0 %v1917
    %2117 = vmatprep.mubr.bf16.mxu0 %v1344
    %2118 = vmatmul.mubr.bf16.gmra.mxu0 %v1343
    %v2119 = vpop.f32.mrf.mxu0
    %v2120 = vadd.f32 %v1477, %v2119
    %v2121 = vpop.f32.mrf.mxu0
    %v2122 = vadd.f32 %v1481, %v2121
    %v2123 = vpop.f32.mrf.mxu0
    %v2124 = vpop.f32.mrf.mxu0
    %2125 = vdwg.mxu0
    %2126 = vmatprep.subr.bf16.mxu0 %v1913
    %2127 = vmatpush1.bf16.msra.mxu0 %v1912
    %2128 = vmatprep.subr.bf16.mxu0 %v1906
    %2129 = vmatpush1.bf16.msra.mxu0 %v1905
    %2130 = vmatprep.subr.bf16.mxu0 %v1899
    %2131 = vmatpush1.bf16.msra.mxu0 %v1898
    %2132 = vmatprep.subr.bf16.mxu0 %v1892
    %2133 = vmatpush1.bf16.msra.mxu0 %v1891
    %2134 = vmatprep.subr.bf16.mxu0 %v1885
    %2135 = vmatpush1.bf16.msra.mxu0 %v1884
    %2136 = vmatprep.subr.bf16.mxu0 %v1878
    %2137 = vmatpush1.bf16.msra.mxu0 %v1877
    %2138 = vmatprep.subr.bf16.mxu0 %v1871
    %2139 = vmatpush1.bf16.msra.mxu0 %v1870
    %2140 = vmatprep.subr.bf16.mxu0 %v1864
    %2141 = vmatpush1.bf16.msra.mxu0 %v1863
    %2142 = vmatprep.subr.bf16.mxu0 %v1969
    %2143 = vmatpush2.bf16.msra.mxu0 %v1968
    %2144 = vmatprep.subr.bf16.mxu0 %v1962
    %2145 = vmatpush2.bf16.msra.mxu0 %v1961
    %2146 = vmatprep.subr.bf16.mxu0 %v1955
    %2147 = vmatpush2.bf16.msra.mxu0 %v1954
    %2148 = vmatprep.subr.bf16.mxu0 %v1948
    %2149 = vmatpush2.bf16.msra.mxu0 %v1947
    %2150 = vmatprep.subr.bf16.mxu0 %v1941
    %2151 = vmatpush2.bf16.msra.mxu0 %v1940
    %2152 = vmatprep.subr.bf16.mxu0 %v1934
    %2153 = vmatpush2.bf16.msra.mxu0 %v1933
    %2154 = vmatprep.subr.bf16.mxu0 %v1927
    %2155 = vmatpush2.bf16.msra.mxu0 %v1926
    %2156 = vmatprep.subr.bf16.mxu0 %v1920
    %2157 = vmatpush2.bf16.msra.mxu0 %v1919
    %2158 = vmatprep.mubr.bf16.mxu0 %v1344
    %2159 = vmatmul.mubr.bf16.gmra.mxu0 %v1343
    %v2160 = vpop.f32.mrf.mxu0
    %v2161 = vadd.f32 %v1485, %v2160
    %v2162 = vpop.f32.mrf.mxu0
    %v2163 = vadd.f32 %v1489, %v2162
    %v2164 = vpop.f32.mrf.mxu0
    %v2165 = vpop.f32.mrf.mxu0
    %2166 = vdwg.mxu0
    %2167 = vmatprep.subr.bf16.mxu0 %v1915
    %2168 = vmatpush1.bf16.msra.mxu0 %v1914
    %2169 = vmatprep.subr.bf16.mxu0 %v1908
    %2170 = vmatpush1.bf16.msra.mxu0 %v1907
    %2171 = vmatprep.subr.bf16.mxu0 %v1901
    %2172 = vmatpush1.bf16.msra.mxu0 %v1900
    %2173 = vmatprep.subr.bf16.mxu0 %v1894
    %2174 = vmatpush1.bf16.msra.mxu0 %v1893
    %2175 = vmatprep.subr.bf16.mxu0 %v1887
    %2176 = vmatpush1.bf16.msra.mxu0 %v1886
    %2177 = vmatprep.subr.bf16.mxu0 %v1880
    %2178 = vmatpush1.bf16.msra.mxu0 %v1879
    %2179 = vmatprep.subr.bf16.mxu0 %v1873
    %2180 = vmatpush1.bf16.msra.mxu0 %v1872
    %2181 = vmatprep.subr.bf16.mxu0 %v1866
    %2182 = vmatpush1.bf16.msra.mxu0 %v1865
    %2183 = vmatprep.subr.bf16.mxu0 %v1971
    %2184 = vmatpush2.bf16.msra.mxu0 %v1970
    %2185 = vmatprep.subr.bf16.mxu0 %v1964
    %2186 = vmatpush2.bf16.msra.mxu0 %v1963
    %2187 = vmatprep.subr.bf16.mxu0 %v1957
    %2188 = vmatpush2.bf16.msra.mxu0 %v1956
    %2189 = vmatprep.subr.bf16.mxu0 %v1950
    %2190 = vmatpush2.bf16.msra.mxu0 %v1949
    %2191 = vmatprep.subr.bf16.mxu0 %v1943
    %2192 = vmatpush2.bf16.msra.mxu0 %v1942
    %2193 = vmatprep.subr.bf16.mxu0 %v1936
    %2194 = vmatpush2.bf16.msra.mxu0 %v1935
    %2195 = vmatprep.subr.bf16.mxu0 %v1929
    %2196 = vmatpush2.bf16.msra.mxu0 %v1928
    %2197 = vmatprep.subr.bf16.mxu0 %v1922
    %2198 = vmatpush2.bf16.msra.mxu0 %v1921
    %2199 = vmatprep.mubr.bf16.mxu0 %v1344
    %2200 = vmatmul.mubr.bf16.gmra.mxu0 %v1343
    %v2201 = vpop.f32.mrf.mxu0
    %v2202 = vadd.f32 %v1493, %v2201
    %v2203 = vpop.f32.mrf.mxu0
    %v2204 = vadd.f32 %v1497, %v2203
    %v2205 = vpop.f32.mrf.mxu0
    %v2206 = vpop.f32.mrf.mxu0
    %2207 = vdwg.mxu0
    %2208 = vmatprep.subr.bf16.mxu0 0
    %2209 = vmatpush1.bf16.msra.mxu0 %v1916
    %2210 = vmatprep.subr.bf16.mxu0 0
    %2211 = vmatpush1.bf16.msra.mxu0 %v1909
    %2212 = vmatprep.subr.bf16.mxu0 0
    %2213 = vmatpush1.bf16.msra.mxu0 %v1902
    %2214 = vmatprep.subr.bf16.mxu0 0
    %2215 = vmatpush1.bf16.msra.mxu0 %v1895
    %2216 = vmatprep.subr.bf16.mxu0 0
    %2217 = vmatpush1.bf16.msra.mxu0 %v1888
    %2218 = vmatprep.subr.bf16.mxu0 0
    %2219 = vmatpush1.bf16.msra.mxu0 %v1881
    %2220 = vmatprep.subr.bf16.mxu0 0
    %2221 = vmatpush1.bf16.msra.mxu0 %v1874
    %2222 = vmatprep.subr.bf16.mxu0 0
    %2223 = vmatpush1.bf16.msra.mxu0 %v1867
    %2224 = vmatprep.subr.bf16.mxu0 0
    %2225 = vmatpush2.bf16.msra.mxu0 %v1972
    %2226 = vmatprep.subr.bf16.mxu0 0
    %2227 = vmatpush2.bf16.msra.mxu0 %v1965
    %2228 = vmatprep.subr.bf16.mxu0 0
    %2229 = vmatpush2.bf16.msra.mxu0 %v1958
    %2230 = vmatprep.subr.bf16.mxu0 0
    %2231 = vmatpush2.bf16.msra.mxu0 %v1951
    %2232 = vmatprep.subr.bf16.mxu0 0
    %2233 = vmatpush2.bf16.msra.mxu0 %v1944
    %2234 = vmatprep.subr.bf16.mxu0 0
    %2235 = vmatpush2.bf16.msra.mxu0 %v1937
    %2236 = vmatprep.subr.bf16.mxu0 0
    %2237 = vmatpush2.bf16.msra.mxu0 %v1930
    %2238 = vmatprep.subr.bf16.mxu0 0
    %2239 = vmatpush2.bf16.msra.mxu0 %v1923
    %2240 = vmatprep.mubr.bf16.mxu0 %v1344
    %2241 = vmatmul.mubr.bf16.gmra.mxu0 %v1343
    %v2242 = vpop.f32.mrf.mxu0
    %v2243 = vadd.f32 %v1501, %v2242
    %v2244 = vpop.f32.mrf.mxu0
    %v2245 = vpop.f32.mrf.mxu0
    %v2246 = vpop.f32.mrf.mxu0
    %2247 = vdwg.mxu0
    %v2248 = vxor.u32 %v2120, 2147483648
    %v2249 = vxor.u32 %v2122, 2147483648
    %v2250 = vxor.u32 %v2161, 2147483648
    %v2251 = vxor.u32 %v2163, 2147483648
    %v2252 = vxor.u32 %v2202, 2147483648
    %v2253 = vxor.u32 %v2204, 2147483648
    %v2254 = vxor.u32 %v2243, 2147483648
    %v2255 = vmul.f32 %v2248, 1.442695
    %v2256 = vpow.pop %v2255
    %v2257 = vmul.f32 %v2249, 1.442695
    %v2258 = vpow.pop %v2257
    %v2259 = vmul.f32 %v2250, 1.442695
    %v2260 = vpow.pop %v2259
    %v2261 = vmul.f32 %v2251, 1.442695
    %v2262 = vpow.pop %v2261
    %v2263 = vmul.f32 %v2252, 1.442695
    %v2264 = vpow.pop %v2263
    %v2265 = vmul.f32 %v2253, 1.442695
    %v2266 = vpow.pop %v2265
    %v2267 = vmul.f32 %v2254, 1.442695
    %v2268 = vpow.pop %v2267
    %v2269 = vadd.f32 %v2256, 1.0
    %v2270 = vadd.f32 %v2258, 1.0
    %v2271 = vadd.f32 %v2260, 1.0
    %v2272 = vadd.f32 %v2262, 1.0
    %v2273 = vadd.f32 %v2264, 1.0
    %v2274 = vadd.f32 %v2266, 1.0
    %v2275 = vadd.f32 %v2268, 1.0
    %v2276 = vrcp.pop %v2269
    %v2277 = vmul.f32 1.0, %v2276
    %v2278 = vrcp.pop %v2270
    %v2279 = vmul.f32 1.0, %v2278
    %v2280 = vrcp.pop %v2271
    %v2281 = vmul.f32 1.0, %v2280
    %v2282 = vrcp.pop %v2272
    %v2283 = vmul.f32 1.0, %v2282
    %v2284 = vrcp.pop %v2273
    %v2285 = vmul.f32 1.0, %v2284
    %v2286 = vrcp.pop %v2274
    %v2287 = vmul.f32 1.0, %v2286
    %v2288 = vrcp.pop %v2275
    %v2289 = vmul.f32 1.0, %v2288
    %v2290 = vpack.c.bf16 %v2277, %v2277
    %v2291 = vpack.c.bf16 %v2279, %v2279
    %v2292 = vpack.c.bf16 %v2281, %v2281
    %v2293 = vpack.c.bf16 %v2283, %v2283
    %v2294 = vpack.c.bf16 %v2285, %v2285
    %v2295 = vpack.c.bf16 %v2287, %v2287
    %v2296 = vpack.c.bf16 %v2289, %v2289
    %v2304 = vunpack.c.l.b16 %v2290
    %v2305 = vunpack.c.l.b16 %v2291
    %v2306 = vunpack.c.l.b16 %v2292
    %v2307 = vunpack.c.l.b16 %v2293
    %v2308 = vunpack.c.l.b16 %v2294
    %v2309 = vunpack.c.l.b16 %v2295
    %v2310 = vunpack.c.l.b16 %v2296
    %v2311 = vpack.c.b16 %v2305, %v2304
    %v2312 = vpack.c.b16 %v2307, %v2306
    %v2313 = vpack.c.b16 %v2309, %v2308
    %v2314 = vpack.c.b16 %v2310, %v2310
    %2319 = vst [vmem:[#allocation2] sm:$0xff] %v2311
    %2320 = vst [vmem:[#allocation2 + $0x8] sm:$0xff] %v2312
    %2321 = vst [vmem:[#allocation2 + $0x10] sm:$0xff] %v2313
    %vm2322 = vcmask 125952
    %2323 = vst.msk [vmem:[#allocation2 + $0x18] sm:$0xf] %vm2322, %v2314
    %2324 = vst [vmem:[#allocation4] sm:$0xff] %v1115
    // Predicated region
    $region38: #{tpu_custom_call.1} parent=1 // pred_check
      _
    $region39: #{tpu_custom_call.1} parent=1 // pred_check_branch
      %2326 = sbr.rel (0) target = $region41
    $region40: #{tpu_custom_call.1} parent=1 // pred_region
      %s2328 = ssub.s32 448, 448
      %2329 = vsyncadd [#allocation3], %s2328
      %s2331 = sshll.u32 [#allocation2], 4
      %s2332 = int_to_ptr.vmem [resolvable:$true] %s2331
      %2334 = dma.vmem_to_hbm [thread:$0]  %s2332, 448, %s9, [#allocation3]
    $region41: #{tpu_custom_call.1} parent=1 // pred_fallthru
      _
    // Predicated region
    $region42: #{tpu_custom_call.1} parent=1 // pred_check
      _
    $region43: #{tpu_custom_call.1} parent=1 // pred_check_branch
      %2336 = sbr.rel (0) target = $region45
    $region44: #{tpu_custom_call.1} parent=1 // pred_region
      %s2338 = ssub.s32 128, 128
      %2339 = vsyncadd [#allocation5], %s2338
      %s2341 = sshll.u32 [#allocation4], 4
      %s2342 = int_to_ptr.vmem [resolvable:$true] %s2341
      %2344 = dma.vmem_to_hbm [thread:$0]  %s2342, 128, %s10, [#allocation5]
    $region45: #{tpu_custom_call.1} parent=1 // pred_fallthru
      _
    // Predicated region
    $region46: #{tpu_custom_call.1} parent=1 // pred_check
      _
    $region47: #{tpu_custom_call.1} parent=1 // pred_check_branch
      %2346 = sbr.rel (0) target = $region49
    $region48: #{tpu_custom_call.1} parent=1 // pred_region
      %2347 = dma.done [#allocation3], 448
    $region49: #{tpu_custom_call.1} parent=1 // pred_fallthru
      _
    // Predicated region
    $region50: #{tpu_custom_call.1} parent=1 // pred_check
      _
    $region51: #{tpu_custom_call.1} parent=1 // pred_check_branch
      %2349 = sbr.rel (0) target = $region53
    $region52: #{tpu_custom_call.1} parent=1 // pred_region
      %2350 = dma.done [#allocation5], 128
    $region53: #{tpu_custom_call.1} parent=1 // pred_fallthru
      _
    %2351 = vsyncpa [#allocation3], 1
    %2352 = vsyncpa [#allocation5], 1

</llo_original>
